<compile_context>
chip_gen: v5e
topology: v5e:2x2
jax: 0.10.0
libtpu: 0.0.40
codegen_flags: <defaults>
</compile_context>

<pallas_src>
import functools
import math

import jax
import jax.numpy as jnp
import numpy as np
from jax.experimental import pallas as pl
from jax.experimental.pallas import tpu as pltpu


def _embedding_kernel(ids_ref, table_hbm, o_ref, row_buf, sems, *,
                      tokens_per_block, scale):
    """Double-buffered row gather from HBM + scale-by-sqrt(d_model) epilogue."""
    i = pl.program_id(0)
    n_blocks = pl.num_programs(0)
    slot = i & 1

    def issue_block(block_idx, slot_idx):
        base = block_idx * tokens_per_block
        for j in range(tokens_per_block):
            row = ids_ref[base + j]                       # scalar read from SMEM
            pltpu.make_async_copy(
                table_hbm.at[row],                        # one embedding row (HBM)
                row_buf.at[slot_idx, j],                  # -> VMEM slot
                sems.at[slot_idx],                        # shared per-slot DMA sem
            ).start()

    # Prime the pipeline: block 0 goes into slot 0 on the first step only.
    @pl.when(i == 0)
    def _():
        issue_block(0, 0)

    # Prefetch the NEXT block's rows into the other slot before waiting, so its
    # gather latency hides behind this block's scale + store.
    @pl.when(i + 1 < n_blocks)
    def _():
        issue_block(i + 1, 1 - slot)

    # One aggregate wait for all tokens_per_block row copies of this slot
    # (wait amount = tokens_per_block * d_model * itemsize bytes).
    pltpu.make_async_copy(
        table_hbm.at[pl.ds(0, tokens_per_block)],
        row_buf.at[slot],
        sems.at[slot],
    ).wait()

    # Cheap VPU epilogue; lane-dense full-block store.
    rows = row_buf[slot].astype(jnp.float32) * scale
    o_ref[...] = rows.astype(o_ref.dtype)


def _sublane_pack(dtype):
    """Minimum second-minor multiple for this dtype (8 f32 / 16 bf16 / 32 int8)."""
    itemsize = jnp.dtype(dtype).itemsize
    return 8 * max(1, 4 // itemsize)


def input_embeddings(ids, table, *, tokens_per_block=None):
    """Pallas equivalent of InputEmbeddings.forward: table[ids] * sqrt(d_model)."""
    orig_shape = ids.shape
    vocab, d_model = table.shape
    itemsize = jnp.dtype(table.dtype).itemsize

    ids_flat = ids.reshape(-1).astype(jnp.int32)
    # Clamp so untrusted ids can never trigger OOB HBM DMAs (hard device fault).
    ids_flat = jnp.clip(ids_flat, 0, vocab - 1)
    n_tok = ids_flat.shape[0]

    # Dtype-aware block size: big enough to amortize per-grid-step overhead and
    # keep many row DMAs concurrent, but no larger than needed for tiny inputs.
    pack = _sublane_pack(table.dtype)
    if tokens_per_block is None:
        tokens_per_block = min(256, pl.cdiv(n_tok, pack) * pack)
    tokens_per_block = max(pack, pl.cdiv(tokens_per_block, pack) * pack)
    if vocab >= pack:
        # Aggregate-wait descriptor slices `tokens_per_block` table rows.
        tokens_per_block = min(tokens_per_block, (vocab // pack) * pack)

    # Pad token count to a block multiple (row 0 is a valid throwaway target).
    n_pad = (-n_tok) % tokens_per_block
    if n_pad:
        ids_flat = jnp.concatenate([ids_flat, jnp.zeros((n_pad,), jnp.int32)])
    n_total = n_tok + n_pad
    n_blocks = n_total // tokens_per_block

    # VMEM budget: 2x output block (pipeline) + 2-slot gather buffer + slack.
    block_bytes = tokens_per_block * d_model * itemsize
    vmem_bytes = int(min(48 * 2**20, max(4 * block_bytes + (2 << 20), 16 * 2**20)))

    cost = pl.CostEstimate(
        flops=n_total * d_model,
        transcendentals=0,
        bytes_accessed=2 * n_total * d_model * itemsize + n_total * 4,
    )

    kern = functools.partial(
        _embedding_kernel,
        tokens_per_block=tokens_per_block,
        scale=math.sqrt(d_model),
    )

    out = pl.pallas_call(
        kern,
        out_shape=jax.ShapeDtypeStruct((n_total, d_model), table.dtype),
        grid_spec=pltpu.PrefetchScalarGridSpec(
            num_scalar_prefetch=1,                         # ids -> SMEM before grid
            grid=(n_blocks,),
            in_specs=[pl.BlockSpec(memory_space=pl.ANY)],  # table stays in HBM
            out_specs=pl.BlockSpec(
                (tokens_per_block, d_model), lambda i, ids: (i, 0)
            ),
            scratch_shapes=[
                pltpu.VMEM((2, tokens_per_block, d_model), table.dtype),
                pltpu.SemaphoreType.DMA((2,)),             # one shared sem per slot
            ],
        ),
        compiler_params=pltpu.CompilerParams(
            # Cross-step double-buffered gather => sequential grid required.
            dimension_semantics=("arbitrary",),
            vmem_limit_bytes=vmem_bytes,
        ),
        cost_estimate=cost,
    )(ids_flat, table)

    return out[:n_tok].reshape(*orig_shape, d_model)


if __name__ == "__main__":
    # Small shapes consistent with the module: batch=2, seq=8, vocab=512,
    # d_model=128 (lane-dense).
    B, S, VOCAB, D_MODEL = 2, 8, 512, 128
    key = jax.random.PRNGKey(0)
    k_tab, k_ids = jax.random.split(key)

    table = jax.random.normal(k_tab, (VOCAB, D_MODEL), jnp.float32) * 0.02
    ids = jax.random.randint(k_ids, (B, S), 0, VOCAB, dtype=jnp.int32)

    out = jax.block_until_ready(input_embeddings(ids, table))

    ref = table[ids] * math.sqrt(D_MODEL)
    np.testing.assert_allclose(np.asarray(out), np.asarray(ref),
                               rtol=1e-6, atol=1e-6)
    print("KERNEL_OK")
</pallas_src>

<mosaic_0001>
module attributes {stable_mosaic.version = 11 : i64} {
  func.func @_embedding_kernel(%arg0: i32, %arg1: memref<16xi32, #tpu.memory_space<smem>>, %arg2: memref<512x128xf32, #tpu.memory_space<any>>, %arg3: memref<16x128xf32, #tpu.memory_space<vmem>>, %arg4: memref<2x16x128xf32, #tpu.memory_space<vmem>>, %arg5: memref<2x!tpu.dma_semaphore, #tpu.memory_space<semaphore_mem>>) attributes {dimension_semantics = [#tpu.dimension_semantics<arbitrary>], iteration_bounds = array<i64: 1>, scalar_prefetch = 1 : i64, scratch_operands = 2 : i64, tpu.core_type = #tpu.core_type<tc>, window_params = [{}, {transform_indices = @transform_1, window_bounds = array<i64: 16, 128>}]} {
    %c1_i32 = arith.constant 1 : i32
    %0 = arith.andi %arg0, %c1_i32 : i32
    %c0_i32 = arith.constant 0 : i32
    %1 = arith.cmpi eq, %arg0, %c0_i32 : i32
    %2 = arith.extui %1 : i1 to i32
    %c0_i32_0 = arith.constant 0 : i32
    %3 = arith.cmpi ne, %2, %c0_i32_0 : i32
    scf.if %3 {
      %c0_11 = arith.constant 0 : index
      %19 = memref.load %arg1[%c0_11] : memref<16xi32, #tpu.memory_space<smem>>
      %c0_i32_12 = arith.constant 0 : i32
      %c0_i32_13 = arith.constant 0 : i32
      %c0_i32_14 = arith.constant 0 : i32
      %c0_i32_15 = arith.constant 0 : i32
      %20 = tpu.memref_slice %arg2[%19, %c0_i32_15] : memref<512x128xf32, #tpu.memory_space<any>> -> memref<1x128xf32, #tpu.memory_space<any>>
      %21 = tpu.memref_squeeze %20 : memref<1x128xf32, #tpu.memory_space<any>> -> memref<128xf32, #tpu.memory_space<any>>
      %c0_i32_16 = arith.constant 0 : i32
      %22 = tpu.memref_slice %arg4[%c0_i32_12, %c0_i32_13, %c0_i32_16] : memref<2x16x128xf32, #tpu.memory_space<vmem>> -> memref<1x1x128xf32, #tpu.memory_space<vmem>>
      %23 = tpu.memref_squeeze %22 : memref<1x1x128xf32, #tpu.memory_space<vmem>> -> memref<128xf32, #tpu.memory_space<vmem>>
      %24 = tpu.memref_slice %arg5[%c0_i32_14] : memref<2x!tpu.dma_semaphore, #tpu.memory_space<semaphore_mem>> -> memref<1x!tpu.dma_semaphore, #tpu.memory_space<semaphore_mem>>
      %25 = tpu.memref_squeeze %24 : memref<1x!tpu.dma_semaphore, #tpu.memory_space<semaphore_mem>> -> memref<!tpu.dma_semaphore, #tpu.memory_space<semaphore_mem>>
      tpu.enqueue_dma source(%21 : memref<128xf32, #tpu.memory_space<any>>) target(%23 : memref<128xf32, #tpu.memory_space<vmem>>) target_semaphore(%25 : memref<!tpu.dma_semaphore, #tpu.memory_space<semaphore_mem>>)
      %c1 = arith.constant 1 : index
      %26 = memref.load %arg1[%c1] : memref<16xi32, #tpu.memory_space<smem>>
      %c0_i32_17 = arith.constant 0 : i32
      %c1_i32_18 = arith.constant 1 : i32
      %c0_i32_19 = arith.constant 0 : i32
      %c0_i32_20 = arith.constant 0 : i32
      %27 = tpu.memref_slice %arg2[%26, %c0_i32_20] : memref<512x128xf32, #tpu.memory_space<any>> -> memref<1x128xf32, #tpu.memory_space<any>>
      %28 = tpu.memref_squeeze %27 : memref<1x128xf32, #tpu.memory_space<any>> -> memref<128xf32, #tpu.memory_space<any>>
      %c0_i32_21 = arith.constant 0 : i32
      %29 = tpu.memref_slice %arg4[%c0_i32_17, %c1_i32_18, %c0_i32_21] : memref<2x16x128xf32, #tpu.memory_space<vmem>> -> memref<1x1x128xf32, #tpu.memory_space<vmem>>
      %30 = tpu.memref_squeeze %29 : memref<1x1x128xf32, #tpu.memory_space<vmem>> -> memref<128xf32, #tpu.memory_space<vmem>>
      %31 = tpu.memref_slice %arg5[%c0_i32_19] : memref<2x!tpu.dma_semaphore, #tpu.memory_space<semaphore_mem>> -> memref<1x!tpu.dma_semaphore, #tpu.memory_space<semaphore_mem>>
      %32 = tpu.memref_squeeze %31 : memref<1x!tpu.dma_semaphore, #tpu.memory_space<semaphore_mem>> -> memref<!tpu.dma_semaphore, #tpu.memory_space<semaphore_mem>>
      tpu.enqueue_dma source(%28 : memref<128xf32, #tpu.memory_space<any>>) target(%30 : memref<128xf32, #tpu.memory_space<vmem>>) target_semaphore(%32 : memref<!tpu.dma_semaphore, #tpu.memory_space<semaphore_mem>>)
      %c2 = arith.constant 2 : index
      %33 = memref.load %arg1[%c2] : memref<16xi32, #tpu.memory_space<smem>>
      %c0_i32_22 = arith.constant 0 : i32
      %c2_i32 = arith.constant 2 : i32
      %c0_i32_23 = arith.constant 0 : i32
      %c0_i32_24 = arith.constant 0 : i32
      %34 = tpu.memref_slice %arg2[%33, %c0_i32_24] : memref<512x128xf32, #tpu.memory_space<any>> -> memref<1x128xf32, #tpu.memory_space<any>>
      %35 = tpu.memref_squeeze %34 : memref<1x128xf32, #tpu.memory_space<any>> -> memref<128xf32, #tpu.memory_space<any>>
      %c0_i32_25 = arith.constant 0 : i32
      %36 = tpu.memref_slice %arg4[%c0_i32_22, %c2_i32, %c0_i32_25] : memref<2x16x128xf32, #tpu.memory_space<vmem>> -> memref<1x1x128xf32, #tpu.memory_space<vmem>>
      %37 = tpu.memref_squeeze %36 : memref<1x1x128xf32, #tpu.memory_space<vmem>> -> memref<128xf32, #tpu.memory_space<vmem>>
      %38 = tpu.memref_slice %arg5[%c0_i32_23] : memref<2x!tpu.dma_semaphore, #tpu.memory_space<semaphore_mem>> -> memref<1x!tpu.dma_semaphore, #tpu.memory_space<semaphore_mem>>
      %39 = tpu.memref_squeeze %38 : memref<1x!tpu.dma_semaphore, #tpu.memory_space<semaphore_mem>> -> memref<!tpu.dma_semaphore, #tpu.memory_space<semaphore_mem>>
      tpu.enqueue_dma source(%35 : memref<128xf32, #tpu.memory_space<any>>) target(%37 : memref<128xf32, #tpu.memory_space<vmem>>) target_semaphore(%39 : memref<!tpu.dma_semaphore, #tpu.memory_space<semaphore_mem>>)
      %c3 = arith.constant 3 : index
      %40 = memref.load %arg1[%c3] : memref<16xi32, #tpu.memory_space<smem>>
      %c0_i32_26 = arith.constant 0 : i32
      %c3_i32 = arith.constant 3 : i32
      %c0_i32_27 = arith.constant 0 : i32
      %c0_i32_28 = arith.constant 0 : i32
      %41 = tpu.memref_slice %arg2[%40, %c0_i32_28] : memref<512x128xf32, #tpu.memory_space<any>> -> memref<1x128xf32, #tpu.memory_space<any>>
      %42 = tpu.memref_squeeze %41 : memref<1x128xf32, #tpu.memory_space<any>> -> memref<128xf32, #tpu.memory_space<any>>
      %c0_i32_29 = arith.constant 0 : i32
      %43 = tpu.memref_slice %arg4[%c0_i32_26, %c3_i32, %c0_i32_29] : memref<2x16x128xf32, #tpu.memory_space<vmem>> -> memref<1x1x128xf32, #tpu.memory_space<vmem>>
      %44 = tpu.memref_squeeze %43 : memref<1x1x128xf32, #tpu.memory_space<vmem>> -> memref<128xf32, #tpu.memory_space<vmem>>
      %45 = tpu.memref_slice %arg5[%c0_i32_27] : memref<2x!tpu.dma_semaphore, #tpu.memory_space<semaphore_mem>> -> memref<1x!tpu.dma_semaphore, #tpu.memory_space<semaphore_mem>>
      %46 = tpu.memref_squeeze %45 : memref<1x!tpu.dma_semaphore, #tpu.memory_space<semaphore_mem>> -> memref<!tpu.dma_semaphore, #tpu.memory_space<semaphore_mem>>
      tpu.enqueue_dma source(%42 : memref<128xf32, #tpu.memory_space<any>>) target(%44 : memref<128xf32, #tpu.memory_space<vmem>>) target_semaphore(%46 : memref<!tpu.dma_semaphore, #tpu.memory_space<semaphore_mem>>)
      %c4 = arith.constant 4 : index
      %47 = memref.load %arg1[%c4] : memref<16xi32, #tpu.memory_space<smem>>
      %c0_i32_30 = arith.constant 0 : i32
      %c4_i32 = arith.constant 4 : i32
      %c0_i32_31 = arith.constant 0 : i32
      %c0_i32_32 = arith.constant 0 : i32
      %48 = tpu.memref_slice %arg2[%47, %c0_i32_32] : memref<512x128xf32, #tpu.memory_space<any>> -> memref<1x128xf32, #tpu.memory_space<any>>
      %49 = tpu.memref_squeeze %48 : memref<1x128xf32, #tpu.memory_space<any>> -> memref<128xf32, #tpu.memory_space<any>>
      %c0_i32_33 = arith.constant 0 : i32
      %50 = tpu.memref_slice %arg4[%c0_i32_30, %c4_i32, %c0_i32_33] : memref<2x16x128xf32, #tpu.memory_space<vmem>> -> memref<1x1x128xf32, #tpu.memory_space<vmem>>
      %51 = tpu.memref_squeeze %50 : memref<1x1x128xf32, #tpu.memory_space<vmem>> -> memref<128xf32, #tpu.memory_space<vmem>>
      %52 = tpu.memref_slice %arg5[%c0_i32_31] : memref<2x!tpu.dma_semaphore, #tpu.memory_space<semaphore_mem>> -> memref<1x!tpu.dma_semaphore, #tpu.memory_space<semaphore_mem>>
      %53 = tpu.memref_squeeze %52 : memref<1x!tpu.dma_semaphore, #tpu.memory_space<semaphore_mem>> -> memref<!tpu.dma_semaphore, #tpu.memory_space<semaphore_mem>>
      tpu.enqueue_dma source(%49 : memref<128xf32, #tpu.memory_space<any>>) target(%51 : memref<128xf32, #tpu.memory_space<vmem>>) target_semaphore(%53 : memref<!tpu.dma_semaphore, #tpu.memory_space<semaphore_mem>>)
      %c5 = arith.constant 5 : index
      %54 = memref.load %arg1[%c5] : memref<16xi32, #tpu.memory_space<smem>>
      %c0_i32_34 = arith.constant 0 : i32
      %c5_i32 = arith.constant 5 : i32
      %c0_i32_35 = arith.constant 0 : i32
      %c0_i32_36 = arith.constant 0 : i32
      %55 = tpu.memref_slice %arg2[%54, %c0_i32_36] : memref<512x128xf32, #tpu.memory_space<any>> -> memref<1x128xf32, #tpu.memory_space<any>>
      %56 = tpu.memref_squeeze %55 : memref<1x128xf32, #tpu.memory_space<any>> -> memref<128xf32, #tpu.memory_space<any>>
      %c0_i32_37 = arith.constant 0 : i32
      %57 = tpu.memref_slice %arg4[%c0_i32_34, %c5_i32, %c0_i32_37] : memref<2x16x128xf32, #tpu.memory_space<vmem>> -> memref<1x1x128xf32, #tpu.memory_space<vmem>>
      %58 = tpu.memref_squeeze %57 : memref<1x1x128xf32, #tpu.memory_space<vmem>> -> memref<128xf32, #tpu.memory_space<vmem>>
      %59 = tpu.memref_slice %arg5[%c0_i32_35] : memref<2x!tpu.dma_semaphore, #tpu.memory_space<semaphore_mem>> -> memref<1x!tpu.dma_semaphore, #tpu.memory_space<semaphore_mem>>
      %60 = tpu.memref_squeeze %59 : memref<1x!tpu.dma_semaphore, #tpu.memory_space<semaphore_mem>> -> memref<!tpu.dma_semaphore, #tpu.memory_space<semaphore_mem>>
      tpu.enqueue_dma source(%56 : memref<128xf32, #tpu.memory_space<any>>) target(%58 : memref<128xf32, #tpu.memory_space<vmem>>) target_semaphore(%60 : memref<!tpu.dma_semaphore, #tpu.memory_space<semaphore_mem>>)
      %c6 = arith.constant 6 : index
      %61 = memref.load %arg1[%c6] : memref<16xi32, #tpu.memory_space<smem>>
      %c0_i32_38 = arith.constant 0 : i32
      %c6_i32 = arith.constant 6 : i32
      %c0_i32_39 = arith.constant 0 : i32
      %c0_i32_40 = arith.constant 0 : i32
      %62 = tpu.memref_slice %arg2[%61, %c0_i32_40] : memref<512x128xf32, #tpu.memory_space<any>> -> memref<1x128xf32, #tpu.memory_space<any>>
      %63 = tpu.memref_squeeze %62 : memref<1x128xf32, #tpu.memory_space<any>> -> memref<128xf32, #tpu.memory_space<any>>
      %c0_i32_41 = arith.constant 0 : i32
      %64 = tpu.memref_slice %arg4[%c0_i32_38, %c6_i32, %c0_i32_41] : memref<2x16x128xf32, #tpu.memory_space<vmem>> -> memref<1x1x128xf32, #tpu.memory_space<vmem>>
      %65 = tpu.memref_squeeze %64 : memref<1x1x128xf32, #tpu.memory_space<vmem>> -> memref<128xf32, #tpu.memory_space<vmem>>
      %66 = tpu.memref_slice %arg5[%c0_i32_39] : memref<2x!tpu.dma_semaphore, #tpu.memory_space<semaphore_mem>> -> memref<1x!tpu.dma_semaphore, #tpu.memory_space<semaphore_mem>>
      %67 = tpu.memref_squeeze %66 : memref<1x!tpu.dma_semaphore, #tpu.memory_space<semaphore_mem>> -> memref<!tpu.dma_semaphore, #tpu.memory_space<semaphore_mem>>
      tpu.enqueue_dma source(%63 : memref<128xf32, #tpu.memory_space<any>>) target(%65 : memref<128xf32, #tpu.memory_space<vmem>>) target_semaphore(%67 : memref<!tpu.dma_semaphore, #tpu.memory_space<semaphore_mem>>)
      %c7 = arith.constant 7 : index
      %68 = memref.load %arg1[%c7] : memref<16xi32, #tpu.memory_space<smem>>
      %c0_i32_42 = arith.constant 0 : i32
      %c7_i32 = arith.constant 7 : i32
      %c0_i32_43 = arith.constant 0 : i32
      %c0_i32_44 = arith.constant 0 : i32
      %69 = tpu.memref_slice %arg2[%68, %c0_i32_44] : memref<512x128xf32, #tpu.memory_space<any>> -> memref<1x128xf32, #tpu.memory_space<any>>
      %70 = tpu.memref_squeeze %69 : memref<1x128xf32, #tpu.memory_space<any>> -> memref<128xf32, #tpu.memory_space<any>>
      %c0_i32_45 = arith.constant 0 : i32
      %71 = tpu.memref_slice %arg4[%c0_i32_42, %c7_i32, %c0_i32_45] : memref<2x16x128xf32, #tpu.memory_space<vmem>> -> memref<1x1x128xf32, #tpu.memory_space<vmem>>
      %72 = tpu.memref_squeeze %71 : memref<1x1x128xf32, #tpu.memory_space<vmem>> -> memref<128xf32, #tpu.memory_space<vmem>>
      %73 = tpu.memref_slice %arg5[%c0_i32_43] : memref<2x!tpu.dma_semaphore, #tpu.memory_space<semaphore_mem>> -> memref<1x!tpu.dma_semaphore, #tpu.memory_space<semaphore_mem>>
      %74 = tpu.memref_squeeze %73 : memref<1x!tpu.dma_semaphore, #tpu.memory_space<semaphore_mem>> -> memref<!tpu.dma_semaphore, #tpu.memory_space<semaphore_mem>>
      tpu.enqueue_dma source(%70 : memref<128xf32, #tpu.memory_space<any>>) target(%72 : memref<128xf32, #tpu.memory_space<vmem>>) target_semaphore(%74 : memref<!tpu.dma_semaphore, #tpu.memory_space<semaphore_mem>>)
      %c8 = arith.constant 8 : index
      %75 = memref.load %arg1[%c8] : memref<16xi32, #tpu.memory_space<smem>>
      %c0_i32_46 = arith.constant 0 : i32
      %c8_i32 = arith.constant 8 : i32
      %c0_i32_47 = arith.constant 0 : i32
      %c0_i32_48 = arith.constant 0 : i32
      %76 = tpu.memref_slice %arg2[%75, %c0_i32_48] : memref<512x128xf32, #tpu.memory_space<any>> -> memref<1x128xf32, #tpu.memory_space<any>>
      %77 = tpu.memref_squeeze %76 : memref<1x128xf32, #tpu.memory_space<any>> -> memref<128xf32, #tpu.memory_space<any>>
      %c0_i32_49 = arith.constant 0 : i32
      %78 = tpu.memref_slice %arg4[%c0_i32_46, %c8_i32, %c0_i32_49] : memref<2x16x128xf32, #tpu.memory_space<vmem>> -> memref<1x1x128xf32, #tpu.memory_space<vmem>>
      %79 = tpu.memref_squeeze %78 : memref<1x1x128xf32, #tpu.memory_space<vmem>> -> memref<128xf32, #tpu.memory_space<vmem>>
      %80 = tpu.memref_slice %arg5[%c0_i32_47] : memref<2x!tpu.dma_semaphore, #tpu.memory_space<semaphore_mem>> -> memref<1x!tpu.dma_semaphore, #tpu.memory_space<semaphore_mem>>
      %81 = tpu.memref_squeeze %80 : memref<1x!tpu.dma_semaphore, #tpu.memory_space<semaphore_mem>> -> memref<!tpu.dma_semaphore, #tpu.memory_space<semaphore_mem>>
      tpu.enqueue_dma source(%77 : memref<128xf32, #tpu.memory_space<any>>) target(%79 : memref<128xf32, #tpu.memory_space<vmem>>) target_semaphore(%81 : memref<!tpu.dma_semaphore, #tpu.memory_space<semaphore_mem>>)
      %c9 = arith.constant 9 : index
      %82 = memref.load %arg1[%c9] : memref<16xi32, #tpu.memory_space<smem>>
      %c0_i32_50 = arith.constant 0 : i32
      %c9_i32 = arith.constant 9 : i32
      %c0_i32_51 = arith.constant 0 : i32
      %c0_i32_52 = arith.constant 0 : i32
      %83 = tpu.memref_slice %arg2[%82, %c0_i32_52] : memref<512x128xf32, #tpu.memory_space<any>> -> memref<1x128xf32, #tpu.memory_space<any>>
      %84 = tpu.memref_squeeze %83 : memref<1x128xf32, #tpu.memory_space<any>> -> memref<128xf32, #tpu.memory_space<any>>
      %c0_i32_53 = arith.constant 0 : i32
      %85 = tpu.memref_slice %arg4[%c0_i32_50, %c9_i32, %c0_i32_53] : memref<2x16x128xf32, #tpu.memory_space<vmem>> -> memref<1x1x128xf32, #tpu.memory_space<vmem>>
      %86 = tpu.memref_squeeze %85 : memref<1x1x128xf32, #tpu.memory_space<vmem>> -> memref<128xf32, #tpu.memory_space<vmem>>
      %87 = tpu.memref_slice %arg5[%c0_i32_51] : memref<2x!tpu.dma_semaphore, #tpu.memory_space<semaphore_mem>> -> memref<1x!tpu.dma_semaphore, #tpu.memory_space<semaphore_mem>>
      %88 = tpu.memref_squeeze %87 : memref<1x!tpu.dma_semaphore, #tpu.memory_space<semaphore_mem>> -> memref<!tpu.dma_semaphore, #tpu.memory_space<semaphore_mem>>
      tpu.enqueue_dma source(%84 : memref<128xf32, #tpu.memory_space<any>>) target(%86 : memref<128xf32, #tpu.memory_space<vmem>>) target_semaphore(%88 : memref<!tpu.dma_semaphore, #tpu.memory_space<semaphore_mem>>)
      %c10 = arith.constant 10 : index
      %89 = memref.load %arg1[%c10] : memref<16xi32, #tpu.memory_space<smem>>
      %c0_i32_54 = arith.constant 0 : i32
      %c10_i32 = arith.constant 10 : i32
      %c0_i32_55 = arith.constant 0 : i32
      %c0_i32_56 = arith.constant 0 : i32
      %90 = tpu.memref_slice %arg2[%89, %c0_i32_56] : memref<512x128xf32, #tpu.memory_space<any>> -> memref<1x128xf32, #tpu.memory_space<any>>
      %91 = tpu.memref_squeeze %90 : memref<1x128xf32, #tpu.memory_space<any>> -> memref<128xf32, #tpu.memory_space<any>>
      %c0_i32_57 = arith.constant 0 : i32
      %92 = tpu.memref_slice %arg4[%c0_i32_54, %c10_i32, %c0_i32_57] : memref<2x16x128xf32, #tpu.memory_space<vmem>> -> memref<1x1x128xf32, #tpu.memory_space<vmem>>
      %93 = tpu.memref_squeeze %92 : memref<1x1x128xf32, #tpu.memory_space<vmem>> -> memref<128xf32, #tpu.memory_space<vmem>>
      %94 = tpu.memref_slice %arg5[%c0_i32_55] : memref<2x!tpu.dma_semaphore, #tpu.memory_space<semaphore_mem>> -> memref<1x!tpu.dma_semaphore, #tpu.memory_space<semaphore_mem>>
      %95 = tpu.memref_squeeze %94 : memref<1x!tpu.dma_semaphore, #tpu.memory_space<semaphore_mem>> -> memref<!tpu.dma_semaphore, #tpu.memory_space<semaphore_mem>>
      tpu.enqueue_dma source(%91 : memref<128xf32, #tpu.memory_space<any>>) target(%93 : memref<128xf32, #tpu.memory_space<vmem>>) target_semaphore(%95 : memref<!tpu.dma_semaphore, #tpu.memory_space<semaphore_mem>>)
      %c11 = arith.constant 11 : index
      %96 = memref.load %arg1[%c11] : memref<16xi32, #tpu.memory_space<smem>>
      %c0_i32_58 = arith.constant 0 : i32
      %c11_i32 = arith.constant 11 : i32
      %c0_i32_59 = arith.constant 0 : i32
      %c0_i32_60 = arith.constant 0 : i32
      %97 = tpu.memref_slice %arg2[%96, %c0_i32_60] : memref<512x128xf32, #tpu.memory_space<any>> -> memref<1x128xf32, #tpu.memory_space<any>>
      %98 = tpu.memref_squeeze %97 : memref<1x128xf32, #tpu.memory_space<any>> -> memref<128xf32, #tpu.memory_space<any>>
      %c0_i32_61 = arith.constant 0 : i32
      %99 = tpu.memref_slice %arg4[%c0_i32_58, %c11_i32, %c0_i32_61] : memref<2x16x128xf32, #tpu.memory_space<vmem>> -> memref<1x1x128xf32, #tpu.memory_space<vmem>>
      %100 = tpu.memref_squeeze %99 : memref<1x1x128xf32, #tpu.memory_space<vmem>> -> memref<128xf32, #tpu.memory_space<vmem>>
      %101 = tpu.memref_slice %arg5[%c0_i32_59] : memref<2x!tpu.dma_semaphore, #tpu.memory_space<semaphore_mem>> -> memref<1x!tpu.dma_semaphore, #tpu.memory_space<semaphore_mem>>
      %102 = tpu.memref_squeeze %101 : memref<1x!tpu.dma_semaphore, #tpu.memory_space<semaphore_mem>> -> memref<!tpu.dma_semaphore, #tpu.memory_space<semaphore_mem>>
      tpu.enqueue_dma source(%98 : memref<128xf32, #tpu.memory_space<any>>) target(%100 : memref<128xf32, #tpu.memory_space<vmem>>) target_semaphore(%102 : memref<!tpu.dma_semaphore, #tpu.memory_space<semaphore_mem>>)
      %c12 = arith.constant 12 : index
      %103 = memref.load %arg1[%c12] : memref<16xi32, #tpu.memory_space<smem>>
      %c0_i32_62 = arith.constant 0 : i32
      %c12_i32 = arith.constant 12 : i32
      %c0_i32_63 = arith.constant 0 : i32
      %c0_i32_64 = arith.constant 0 : i32
      %104 = tpu.memref_slice %arg2[%103, %c0_i32_64] : memref<512x128xf32, #tpu.memory_space<any>> -> memref<1x128xf32, #tpu.memory_space<any>>
      %105 = tpu.memref_squeeze %104 : memref<1x128xf32, #tpu.memory_space<any>> -> memref<128xf32, #tpu.memory_space<any>>
      %c0_i32_65 = arith.constant 0 : i32
      %106 = tpu.memref_slice %arg4[%c0_i32_62, %c12_i32, %c0_i32_65] : memref<2x16x128xf32, #tpu.memory_space<vmem>> -> memref<1x1x128xf32, #tpu.memory_space<vmem>>
      %107 = tpu.memref_squeeze %106 : memref<1x1x128xf32, #tpu.memory_space<vmem>> -> memref<128xf32, #tpu.memory_space<vmem>>
      %108 = tpu.memref_slice %arg5[%c0_i32_63] : memref<2x!tpu.dma_semaphore, #tpu.memory_space<semaphore_mem>> -> memref<1x!tpu.dma_semaphore, #tpu.memory_space<semaphore_mem>>
      %109 = tpu.memref_squeeze %108 : memref<1x!tpu.dma_semaphore, #tpu.memory_space<semaphore_mem>> -> memref<!tpu.dma_semaphore, #tpu.memory_space<semaphore_mem>>
      tpu.enqueue_dma source(%105 : memref<128xf32, #tpu.memory_space<any>>) target(%107 : memref<128xf32, #tpu.memory_space<vmem>>) target_semaphore(%109 : memref<!tpu.dma_semaphore, #tpu.memory_space<semaphore_mem>>)
      %c13 = arith.constant 13 : index
      %110 = memref.load %arg1[%c13] : memref<16xi32, #tpu.memory_space<smem>>
      %c0_i32_66 = arith.constant 0 : i32
      %c13_i32 = arith.constant 13 : i32
      %c0_i32_67 = arith.constant 0 : i32
      %c0_i32_68 = arith.constant 0 : i32
      %111 = tpu.memref_slice %arg2[%110, %c0_i32_68] : memref<512x128xf32, #tpu.memory_space<any>> -> memref<1x128xf32, #tpu.memory_space<any>>
      %112 = tpu.memref_squeeze %111 : memref<1x128xf32, #tpu.memory_space<any>> -> memref<128xf32, #tpu.memory_space<any>>
      %c0_i32_69 = arith.constant 0 : i32
      %113 = tpu.memref_slice %arg4[%c0_i32_66, %c13_i32, %c0_i32_69] : memref<2x16x128xf32, #tpu.memory_space<vmem>> -> memref<1x1x128xf32, #tpu.memory_space<vmem>>
      %114 = tpu.memref_squeeze %113 : memref<1x1x128xf32, #tpu.memory_space<vmem>> -> memref<128xf32, #tpu.memory_space<vmem>>
      %115 = tpu.memref_slice %arg5[%c0_i32_67] : memref<2x!tpu.dma_semaphore, #tpu.memory_space<semaphore_mem>> -> memref<1x!tpu.dma_semaphore, #tpu.memory_space<semaphore_mem>>
      %116 = tpu.memref_squeeze %115 : memref<1x!tpu.dma_semaphore, #tpu.memory_space<semaphore_mem>> -> memref<!tpu.dma_semaphore, #tpu.memory_space<semaphore_mem>>
      tpu.enqueue_dma source(%112 : memref<128xf32, #tpu.memory_space<any>>) target(%114 : memref<128xf32, #tpu.memory_space<vmem>>) target_semaphore(%116 : memref<!tpu.dma_semaphore, #tpu.memory_space<semaphore_mem>>)
      %c14 = arith.constant 14 : index
      %117 = memref.load %arg1[%c14] : memref<16xi32, #tpu.memory_space<smem>>
      %c0_i32_70 = arith.constant 0 : i32
      %c14_i32 = arith.constant 14 : i32
      %c0_i32_71 = arith.constant 0 : i32
      %c0_i32_72 = arith.constant 0 : i32
      %118 = tpu.memref_slice %arg2[%117, %c0_i32_72] : memref<512x128xf32, #tpu.memory_space<any>> -> memref<1x128xf32, #tpu.memory_space<any>>
      %119 = tpu.memref_squeeze %118 : memref<1x128xf32, #tpu.memory_space<any>> -> memref<128xf32, #tpu.memory_space<any>>
      %c0_i32_73 = arith.constant 0 : i32
      %120 = tpu.memref_slice %arg4[%c0_i32_70, %c14_i32, %c0_i32_73] : memref<2x16x128xf32, #tpu.memory_space<vmem>> -> memref<1x1x128xf32, #tpu.memory_space<vmem>>
      %121 = tpu.memref_squeeze %120 : memref<1x1x128xf32, #tpu.memory_space<vmem>> -> memref<128xf32, #tpu.memory_space<vmem>>
      %122 = tpu.memref_slice %arg5[%c0_i32_71] : memref<2x!tpu.dma_semaphore, #tpu.memory_space<semaphore_mem>> -> memref<1x!tpu.dma_semaphore, #tpu.memory_space<semaphore_mem>>
      %123 = tpu.memref_squeeze %122 : memref<1x!tpu.dma_semaphore, #tpu.memory_space<semaphore_mem>> -> memref<!tpu.dma_semaphore, #tpu.memory_space<semaphore_mem>>
      tpu.enqueue_dma source(%119 : memref<128xf32, #tpu.memory_space<any>>) target(%121 : memref<128xf32, #tpu.memory_space<vmem>>) target_semaphore(%123 : memref<!tpu.dma_semaphore, #tpu.memory_space<semaphore_mem>>)
      %c15 = arith.constant 15 : index
      %124 = memref.load %arg1[%c15] : memref<16xi32, #tpu.memory_space<smem>>
      %c0_i32_74 = arith.constant 0 : i32
      %c15_i32 = arith.constant 15 : i32
      %c0_i32_75 = arith.constant 0 : i32
      %c0_i32_76 = arith.constant 0 : i32
      %125 = tpu.memref_slice %arg2[%124, %c0_i32_76] : memref<512x128xf32, #tpu.memory_space<any>> -> memref<1x128xf32, #tpu.memory_space<any>>
      %126 = tpu.memref_squeeze %125 : memref<1x128xf32, #tpu.memory_space<any>> -> memref<128xf32, #tpu.memory_space<any>>
      %c0_i32_77 = arith.constant 0 : i32
      %127 = tpu.memref_slice %arg4[%c0_i32_74, %c15_i32, %c0_i32_77] : memref<2x16x128xf32, #tpu.memory_space<vmem>> -> memref<1x1x128xf32, #tpu.memory_space<vmem>>
      %128 = tpu.memref_squeeze %127 : memref<1x1x128xf32, #tpu.memory_space<vmem>> -> memref<128xf32, #tpu.memory_space<vmem>>
      %129 = tpu.memref_slice %arg5[%c0_i32_75] : memref<2x!tpu.dma_semaphore, #tpu.memory_space<semaphore_mem>> -> memref<1x!tpu.dma_semaphore, #tpu.memory_space<semaphore_mem>>
      %130 = tpu.memref_squeeze %129 : memref<1x!tpu.dma_semaphore, #tpu.memory_space<semaphore_mem>> -> memref<!tpu.dma_semaphore, #tpu.memory_space<semaphore_mem>>
      tpu.enqueue_dma source(%126 : memref<128xf32, #tpu.memory_space<any>>) target(%128 : memref<128xf32, #tpu.memory_space<vmem>>) target_semaphore(%130 : memref<!tpu.dma_semaphore, #tpu.memory_space<semaphore_mem>>)
    } else {
    }
    %c1_i32_1 = arith.constant 1 : i32
    %4 = arith.addi %arg0, %c1_i32_1 : i32
    %c1_i32_2 = arith.constant 1 : i32
    %5 = arith.cmpi slt, %4, %c1_i32_2 : i32
    %6 = arith.extui %5 : i1 to i32
    %c0_i32_3 = arith.constant 0 : i32
    %7 = arith.cmpi ne, %6, %c0_i32_3 : i32
    scf.if %7 {
      %c1_i32_11 = arith.constant 1 : i32
      %19 = arith.addi %arg0, %c1_i32_11 : i32
      %c1_i32_12 = arith.constant 1 : i32
      %20 = arith.subi %c1_i32_12, %0 : i32
      %c16_i32 = arith.constant 16 : i32
      %21 = arith.muli %19, %c16_i32 : i32
      %c0_i32_13 = arith.constant 0 : i32
      %22 = arith.addi %21, %c0_i32_13 : i32
      %23 = arith.index_cast %22 : i32 to index
      %24 = memref.load %arg1[%23] : memref<16xi32, #tpu.memory_space<smem>>
      %c0_i32_14 = arith.constant 0 : i32
      %c0_i32_15 = arith.constant 0 : i32
      %25 = tpu.memref_slice %arg2[%24, %c0_i32_15] : memref<512x128xf32, #tpu.memory_space<any>> -> memref<1x128xf32, #tpu.memory_space<any>>
      %26 = tpu.memref_squeeze %25 : memref<1x128xf32, #tpu.memory_space<any>> -> memref<128xf32, #tpu.memory_space<any>>
      %c0_i32_16 = arith.constant 0 : i32
      %27 = tpu.memref_slice %arg4[%20, %c0_i32_14, %c0_i32_16] : memref<2x16x128xf32, #tpu.memory_space<vmem>> -> memref<1x1x128xf32, #tpu.memory_space<vmem>>
      %28 = tpu.memref_squeeze %27 : memref<1x1x128xf32, #tpu.memory_space<vmem>> -> memref<128xf32, #tpu.memory_space<vmem>>
      %29 = tpu.memref_slice %arg5[%20] : memref<2x!tpu.dma_semaphore, #tpu.memory_space<semaphore_mem>> -> memref<1x!tpu.dma_semaphore, #tpu.memory_space<semaphore_mem>>
      %30 = tpu.memref_squeeze %29 : memref<1x!tpu.dma_semaphore, #tpu.memory_space<semaphore_mem>> -> memref<!tpu.dma_semaphore, #tpu.memory_space<semaphore_mem>>
      tpu.enqueue_dma source(%26 : memref<128xf32, #tpu.memory_space<any>>) target(%28 : memref<128xf32, #tpu.memory_space<vmem>>) target_semaphore(%30 : memref<!tpu.dma_semaphore, #tpu.memory_space<semaphore_mem>>)
      %c1_i32_17 = arith.constant 1 : i32
      %31 = arith.addi %21, %c1_i32_17 : i32
      %32 = arith.index_cast %31 : i32 to index
      %33 = memref.load %arg1[%32] : memref<16xi32, #tpu.memory_space<smem>>
      %c1_i32_18 = arith.constant 1 : i32
      %c0_i32_19 = arith.constant 0 : i32
      %34 = tpu.memref_slice %arg2[%33, %c0_i32_19] : memref<512x128xf32, #tpu.memory_space<any>> -> memref<1x128xf32, #tpu.memory_space<any>>
      %35 = tpu.memref_squeeze %34 : memref<1x128xf32, #tpu.memory_space<any>> -> memref<128xf32, #tpu.memory_space<any>>
      %c0_i32_20 = arith.constant 0 : i32
      %36 = tpu.memref_slice %arg4[%20, %c1_i32_18, %c0_i32_20] : memref<2x16x128xf32, #tpu.memory_space<vmem>> -> memref<1x1x128xf32, #tpu.memory_space<vmem>>
      %37 = tpu.memref_squeeze %36 : memref<1x1x128xf32, #tpu.memory_space<vmem>> -> memref<128xf32, #tpu.memory_space<vmem>>
      %38 = tpu.memref_slice %arg5[%20] : memref<2x!tpu.dma_semaphore, #tpu.memory_space<semaphore_mem>> -> memref<1x!tpu.dma_semaphore, #tpu.memory_space<semaphore_mem>>
      %39 = tpu.memref_squeeze %38 : memref<1x!tpu.dma_semaphore, #tpu.memory_space<semaphore_mem>> -> memref<!tpu.dma_semaphore, #tpu.memory_space<semaphore_mem>>
      tpu.enqueue_dma source(%35 : memref<128xf32, #tpu.memory_space<any>>) target(%37 : memref<128xf32, #tpu.memory_space<vmem>>) target_semaphore(%39 : memref<!tpu.dma_semaphore, #tpu.memory_space<semaphore_mem>>)
      %c2_i32 = arith.constant 2 : i32
      %40 = arith.addi %21, %c2_i32 : i32
      %41 = arith.index_cast %40 : i32 to index
      %42 = memref.load %arg1[%41] : memref<16xi32, #tpu.memory_space<smem>>
      %c2_i32_21 = arith.constant 2 : i32
      %c0_i32_22 = arith.constant 0 : i32
      %43 = tpu.memref_slice %arg2[%42, %c0_i32_22] : memref<512x128xf32, #tpu.memory_space<any>> -> memref<1x128xf32, #tpu.memory_space<any>>
      %44 = tpu.memref_squeeze %43 : memref<1x128xf32, #tpu.memory_space<any>> -> memref<128xf32, #tpu.memory_space<any>>
      %c0_i32_23 = arith.constant 0 : i32
      %45 = tpu.memref_slice %arg4[%20, %c2_i32_21, %c0_i32_23] : memref<2x16x128xf32, #tpu.memory_space<vmem>> -> memref<1x1x128xf32, #tpu.memory_space<vmem>>
      %46 = tpu.memref_squeeze %45 : memref<1x1x128xf32, #tpu.memory_space<vmem>> -> memref<128xf32, #tpu.memory_space<vmem>>
      %47 = tpu.memref_slice %arg5[%20] : memref<2x!tpu.dma_semaphore, #tpu.memory_space<semaphore_mem>> -> memref<1x!tpu.dma_semaphore, #tpu.memory_space<semaphore_mem>>
      %48 = tpu.memref_squeeze %47 : memref<1x!tpu.dma_semaphore, #tpu.memory_space<semaphore_mem>> -> memref<!tpu.dma_semaphore, #tpu.memory_space<semaphore_mem>>
      tpu.enqueue_dma source(%44 : memref<128xf32, #tpu.memory_space<any>>) target(%46 : memref<128xf32, #tpu.memory_space<vmem>>) target_semaphore(%48 : memref<!tpu.dma_semaphore, #tpu.memory_space<semaphore_mem>>)
      %c3_i32 = arith.constant 3 : i32
      %49 = arith.addi %21, %c3_i32 : i32
      %50 = arith.index_cast %49 : i32 to index
      %51 = memref.load %arg1[%50] : memref<16xi32, #tpu.memory_space<smem>>
      %c3_i32_24 = arith.constant 3 : i32
      %c0_i32_25 = arith.constant 0 : i32
      %52 = tpu.memref_slice %arg2[%51, %c0_i32_25] : memref<512x128xf32, #tpu.memory_space<any>> -> memref<1x128xf32, #tpu.memory_space<any>>
      %53 = tpu.memref_squeeze %52 : memref<1x128xf32, #tpu.memory_space<any>> -> memref<128xf32, #tpu.memory_space<any>>
      %c0_i32_26 = arith.constant 0 : i32
      %54 = tpu.memref_slice %arg4[%20, %c3_i32_24, %c0_i32_26] : memref<2x16x128xf32, #tpu.memory_space<vmem>> -> memref<1x1x128xf32, #tpu.memory_space<vmem>>
      %55 = tpu.memref_squeeze %54 : memref<1x1x128xf32, #tpu.memory_space<vmem>> -> memref<128xf32, #tpu.memory_space<vmem>>
      %56 = tpu.memref_slice %arg5[%20] : memref<2x!tpu.dma_semaphore, #tpu.memory_space<semaphore_mem>> -> memref<1x!tpu.dma_semaphore, #tpu.memory_space<semaphore_mem>>
      %57 = tpu.memref_squeeze %56 : memref<1x!tpu.dma_semaphore, #tpu.memory_space<semaphore_mem>> -> memref<!tpu.dma_semaphore, #tpu.memory_space<semaphore_mem>>
      tpu.enqueue_dma source(%53 : memref<128xf32, #tpu.memory_space<any>>) target(%55 : memref<128xf32, #tpu.memory_space<vmem>>) target_semaphore(%57 : memref<!tpu.dma_semaphore, #tpu.memory_space<semaphore_mem>>)
      %c4_i32 = arith.constant 4 : i32
      %58 = arith.addi %21, %c4_i32 : i32
      %59 = arith.index_cast %58 : i32 to index
      %60 = memref.load %arg1[%59] : memref<16xi32, #tpu.memory_space<smem>>
      %c4_i32_27 = arith.constant 4 : i32
      %c0_i32_28 = arith.constant 0 : i32
      %61 = tpu.memref_slice %arg2[%60, %c0_i32_28] : memref<512x128xf32, #tpu.memory_space<any>> -> memref<1x128xf32, #tpu.memory_space<any>>
      %62 = tpu.memref_squeeze %61 : memref<1x128xf32, #tpu.memory_space<any>> -> memref<128xf32, #tpu.memory_space<any>>
      %c0_i32_29 = arith.constant 0 : i32
      %63 = tpu.memref_slice %arg4[%20, %c4_i32_27, %c0_i32_29] : memref<2x16x128xf32, #tpu.memory_space<vmem>> -> memref<1x1x128xf32, #tpu.memory_space<vmem>>
      %64 = tpu.memref_squeeze %63 : memref<1x1x128xf32, #tpu.memory_space<vmem>> -> memref<128xf32, #tpu.memory_space<vmem>>
      %65 = tpu.memref_slice %arg5[%20] : memref<2x!tpu.dma_semaphore, #tpu.memory_space<semaphore_mem>> -> memref<1x!tpu.dma_semaphore, #tpu.memory_space<semaphore_mem>>
      %66 = tpu.memref_squeeze %65 : memref<1x!tpu.dma_semaphore, #tpu.memory_space<semaphore_mem>> -> memref<!tpu.dma_semaphore, #tpu.memory_space<semaphore_mem>>
      tpu.enqueue_dma source(%62 : memref<128xf32, #tpu.memory_space<any>>) target(%64 : memref<128xf32, #tpu.memory_space<vmem>>) target_semaphore(%66 : memref<!tpu.dma_semaphore, #tpu.memory_space<semaphore_mem>>)
      %c5_i32 = arith.constant 5 : i32
      %67 = arith.addi %21, %c5_i32 : i32
      %68 = arith.index_cast %67 : i32 to index
      %69 = memref.load %arg1[%68] : memref<16xi32, #tpu.memory_space<smem>>
      %c5_i32_30 = arith.constant 5 : i32
      %c0_i32_31 = arith.constant 0 : i32
      %70 = tpu.memref_slice %arg2[%69, %c0_i32_31] : memref<512x128xf32, #tpu.memory_space<any>> -> memref<1x128xf32, #tpu.memory_space<any>>
      %71 = tpu.memref_squeeze %70 : memref<1x128xf32, #tpu.memory_space<any>> -> memref<128xf32, #tpu.memory_space<any>>
      %c0_i32_32 = arith.constant 0 : i32
      %72 = tpu.memref_slice %arg4[%20, %c5_i32_30, %c0_i32_32] : memref<2x16x128xf32, #tpu.memory_space<vmem>> -> memref<1x1x128xf32, #tpu.memory_space<vmem>>
      %73 = tpu.memref_squeeze %72 : memref<1x1x128xf32, #tpu.memory_space<vmem>> -> memref<128xf32, #tpu.memory_space<vmem>>
      %74 = tpu.memref_slice %arg5[%20] : memref<2x!tpu.dma_semaphore, #tpu.memory_space<semaphore_mem>> -> memref<1x!tpu.dma_semaphore, #tpu.memory_space<semaphore_mem>>
      %75 = tpu.memref_squeeze %74 : memref<1x!tpu.dma_semaphore, #tpu.memory_space<semaphore_mem>> -> memref<!tpu.dma_semaphore, #tpu.memory_space<semaphore_mem>>
      tpu.enqueue_dma source(%71 : memref<128xf32, #tpu.memory_space<any>>) target(%73 : memref<128xf32, #tpu.memory_space<vmem>>) target_semaphore(%75 : memref<!tpu.dma_semaphore, #tpu.memory_space<semaphore_mem>>)
      %c6_i32 = arith.constant 6 : i32
      %76 = arith.addi %21, %c6_i32 : i32
      %77 = arith.index_cast %76 : i32 to index
      %78 = memref.load %arg1[%77] : memref<16xi32, #tpu.memory_space<smem>>
      %c6_i32_33 = arith.constant 6 : i32
      %c0_i32_34 = arith.constant 0 : i32
      %79 = tpu.memref_slice %arg2[%78, %c0_i32_34] : memref<512x128xf32, #tpu.memory_space<any>> -> memref<1x128xf32, #tpu.memory_space<any>>
      %80 = tpu.memref_squeeze %79 : memref<1x128xf32, #tpu.memory_space<any>> -> memref<128xf32, #tpu.memory_space<any>>
      %c0_i32_35 = arith.constant 0 : i32
      %81 = tpu.memref_slice %arg4[%20, %c6_i32_33, %c0_i32_35] : memref<2x16x128xf32, #tpu.memory_space<vmem>> -> memref<1x1x128xf32, #tpu.memory_space<vmem>>
      %82 = tpu.memref_squeeze %81 : memref<1x1x128xf32, #tpu.memory_space<vmem>> -> memref<128xf32, #tpu.memory_space<vmem>>
      %83 = tpu.memref_slice %arg5[%20] : memref<2x!tpu.dma_semaphore, #tpu.memory_space<semaphore_mem>> -> memref<1x!tpu.dma_semaphore, #tpu.memory_space<semaphore_mem>>
      %84 = tpu.memref_squeeze %83 : memref<1x!tpu.dma_semaphore, #tpu.memory_space<semaphore_mem>> -> memref<!tpu.dma_semaphore, #tpu.memory_space<semaphore_mem>>
      tpu.enqueue_dma source(%80 : memref<128xf32, #tpu.memory_space<any>>) target(%82 : memref<128xf32, #tpu.memory_space<vmem>>) target_semaphore(%84 : memref<!tpu.dma_semaphore, #tpu.memory_space<semaphore_mem>>)
      %c7_i32 = arith.constant 7 : i32
      %85 = arith.addi %21, %c7_i32 : i32
      %86 = arith.index_cast %85 : i32 to index
      %87 = memref.load %arg1[%86] : memref<16xi32, #tpu.memory_space<smem>>
      %c7_i32_36 = arith.constant 7 : i32
      %c0_i32_37 = arith.constant 0 : i32
      %88 = tpu.memref_slice %arg2[%87, %c0_i32_37] : memref<512x128xf32, #tpu.memory_space<any>> -> memref<1x128xf32, #tpu.memory_space<any>>
      %89 = tpu.memref_squeeze %88 : memref<1x128xf32, #tpu.memory_space<any>> -> memref<128xf32, #tpu.memory_space<any>>
      %c0_i32_38 = arith.constant 0 : i32
      %90 = tpu.memref_slice %arg4[%20, %c7_i32_36, %c0_i32_38] : memref<2x16x128xf32, #tpu.memory_space<vmem>> -> memref<1x1x128xf32, #tpu.memory_space<vmem>>
      %91 = tpu.memref_squeeze %90 : memref<1x1x128xf32, #tpu.memory_space<vmem>> -> memref<128xf32, #tpu.memory_space<vmem>>
      %92 = tpu.memref_slice %arg5[%20] : memref<2x!tpu.dma_semaphore, #tpu.memory_space<semaphore_mem>> -> memref<1x!tpu.dma_semaphore, #tpu.memory_space<semaphore_mem>>
      %93 = tpu.memref_squeeze %92 : memref<1x!tpu.dma_semaphore, #tpu.memory_space<semaphore_mem>> -> memref<!tpu.dma_semaphore, #tpu.memory_space<semaphore_mem>>
      tpu.enqueue_dma source(%89 : memref<128xf32, #tpu.memory_space<any>>) target(%91 : memref<128xf32, #tpu.memory_space<vmem>>) target_semaphore(%93 : memref<!tpu.dma_semaphore, #tpu.memory_space<semaphore_mem>>)
      %c8_i32 = arith.constant 8 : i32
      %94 = arith.addi %21, %c8_i32 : i32
      %95 = arith.index_cast %94 : i32 to index
      %96 = memref.load %arg1[%95] : memref<16xi32, #tpu.memory_space<smem>>
      %c8_i32_39 = arith.constant 8 : i32
      %c0_i32_40 = arith.constant 0 : i32
      %97 = tpu.memref_slice %arg2[%96, %c0_i32_40] : memref<512x128xf32, #tpu.memory_space<any>> -> memref<1x128xf32, #tpu.memory_space<any>>
      %98 = tpu.memref_squeeze %97 : memref<1x128xf32, #tpu.memory_space<any>> -> memref<128xf32, #tpu.memory_space<any>>
      %c0_i32_41 = arith.constant 0 : i32
      %99 = tpu.memref_slice %arg4[%20, %c8_i32_39, %c0_i32_41] : memref<2x16x128xf32, #tpu.memory_space<vmem>> -> memref<1x1x128xf32, #tpu.memory_space<vmem>>
      %100 = tpu.memref_squeeze %99 : memref<1x1x128xf32, #tpu.memory_space<vmem>> -> memref<128xf32, #tpu.memory_space<vmem>>
      %101 = tpu.memref_slice %arg5[%20] : memref<2x!tpu.dma_semaphore, #tpu.memory_space<semaphore_mem>> -> memref<1x!tpu.dma_semaphore, #tpu.memory_space<semaphore_mem>>
      %102 = tpu.memref_squeeze %101 : memref<1x!tpu.dma_semaphore, #tpu.memory_space<semaphore_mem>> -> memref<!tpu.dma_semaphore, #tpu.memory_space<semaphore_mem>>
      tpu.enqueue_dma source(%98 : memref<128xf32, #tpu.memory_space<any>>) target(%100 : memref<128xf32, #tpu.memory_space<vmem>>) target_semaphore(%102 : memref<!tpu.dma_semaphore, #tpu.memory_space<semaphore_mem>>)
      %c9_i32 = arith.constant 9 : i32
      %103 = arith.addi %21, %c9_i32 : i32
      %104 = arith.index_cast %103 : i32 to index
      %105 = memref.load %arg1[%104] : memref<16xi32, #tpu.memory_space<smem>>
      %c9_i32_42 = arith.constant 9 : i32
      %c0_i32_43 = arith.constant 0 : i32
      %106 = tpu.memref_slice %arg2[%105, %c0_i32_43] : memref<512x128xf32, #tpu.memory_space<any>> -> memref<1x128xf32, #tpu.memory_space<any>>
      %107 = tpu.memref_squeeze %106 : memref<1x128xf32, #tpu.memory_space<any>> -> memref<128xf32, #tpu.memory_space<any>>
      %c0_i32_44 = arith.constant 0 : i32
      %108 = tpu.memref_slice %arg4[%20, %c9_i32_42, %c0_i32_44] : memref<2x16x128xf32, #tpu.memory_space<vmem>> -> memref<1x1x128xf32, #tpu.memory_space<vmem>>
      %109 = tpu.memref_squeeze %108 : memref<1x1x128xf32, #tpu.memory_space<vmem>> -> memref<128xf32, #tpu.memory_space<vmem>>
      %110 = tpu.memref_slice %arg5[%20] : memref<2x!tpu.dma_semaphore, #tpu.memory_space<semaphore_mem>> -> memref<1x!tpu.dma_semaphore, #tpu.memory_space<semaphore_mem>>
      %111 = tpu.memref_squeeze %110 : memref<1x!tpu.dma_semaphore, #tpu.memory_space<semaphore_mem>> -> memref<!tpu.dma_semaphore, #tpu.memory_space<semaphore_mem>>
      tpu.enqueue_dma source(%107 : memref<128xf32, #tpu.memory_space<any>>) target(%109 : memref<128xf32, #tpu.memory_space<vmem>>) target_semaphore(%111 : memref<!tpu.dma_semaphore, #tpu.memory_space<semaphore_mem>>)
      %c10_i32 = arith.constant 10 : i32
      %112 = arith.addi %21, %c10_i32 : i32
      %113 = arith.index_cast %112 : i32 to index
      %114 = memref.load %arg1[%113] : memref<16xi32, #tpu.memory_space<smem>>
      %c10_i32_45 = arith.constant 10 : i32
      %c0_i32_46 = arith.constant 0 : i32
      %115 = tpu.memref_slice %arg2[%114, %c0_i32_46] : memref<512x128xf32, #tpu.memory_space<any>> -> memref<1x128xf32, #tpu.memory_space<any>>
      %116 = tpu.memref_squeeze %115 : memref<1x128xf32, #tpu.memory_space<any>> -> memref<128xf32, #tpu.memory_space<any>>
      %c0_i32_47 = arith.constant 0 : i32
      %117 = tpu.memref_slice %arg4[%20, %c10_i32_45, %c0_i32_47] : memref<2x16x128xf32, #tpu.memory_space<vmem>> -> memref<1x1x128xf32, #tpu.memory_space<vmem>>
      %118 = tpu.memref_squeeze %117 : memref<1x1x128xf32, #tpu.memory_space<vmem>> -> memref<128xf32, #tpu.memory_space<vmem>>
      %119 = tpu.memref_slice %arg5[%20] : memref<2x!tpu.dma_semaphore, #tpu.memory_space<semaphore_mem>> -> memref<1x!tpu.dma_semaphore, #tpu.memory_space<semaphore_mem>>
      %120 = tpu.memref_squeeze %119 : memref<1x!tpu.dma_semaphore, #tpu.memory_space<semaphore_mem>> -> memref<!tpu.dma_semaphore, #tpu.memory_space<semaphore_mem>>
      tpu.enqueue_dma source(%116 : memref<128xf32, #tpu.memory_space<any>>) target(%118 : memref<128xf32, #tpu.memory_space<vmem>>) target_semaphore(%120 : memref<!tpu.dma_semaphore, #tpu.memory_space<semaphore_mem>>)
      %c11_i32 = arith.constant 11 : i32
      %121 = arith.addi %21, %c11_i32 : i32
      %122 = arith.index_cast %121 : i32 to index
      %123 = memref.load %arg1[%122] : memref<16xi32, #tpu.memory_space<smem>>
      %c11_i32_48 = arith.constant 11 : i32
      %c0_i32_49 = arith.constant 0 : i32
      %124 = tpu.memref_slice %arg2[%123, %c0_i32_49] : memref<512x128xf32, #tpu.memory_space<any>> -> memref<1x128xf32, #tpu.memory_space<any>>
      %125 = tpu.memref_squeeze %124 : memref<1x128xf32, #tpu.memory_space<any>> -> memref<128xf32, #tpu.memory_space<any>>
      %c0_i32_50 = arith.constant 0 : i32
      %126 = tpu.memref_slice %arg4[%20, %c11_i32_48, %c0_i32_50] : memref<2x16x128xf32, #tpu.memory_space<vmem>> -> memref<1x1x128xf32, #tpu.memory_space<vmem>>
      %127 = tpu.memref_squeeze %126 : memref<1x1x128xf32, #tpu.memory_space<vmem>> -> memref<128xf32, #tpu.memory_space<vmem>>
      %128 = tpu.memref_slice %arg5[%20] : memref<2x!tpu.dma_semaphore, #tpu.memory_space<semaphore_mem>> -> memref<1x!tpu.dma_semaphore, #tpu.memory_space<semaphore_mem>>
      %129 = tpu.memref_squeeze %128 : memref<1x!tpu.dma_semaphore, #tpu.memory_space<semaphore_mem>> -> memref<!tpu.dma_semaphore, #tpu.memory_space<semaphore_mem>>
      tpu.enqueue_dma source(%125 : memref<128xf32, #tpu.memory_space<any>>) target(%127 : memref<128xf32, #tpu.memory_space<vmem>>) target_semaphore(%129 : memref<!tpu.dma_semaphore, #tpu.memory_space<semaphore_mem>>)
      %c12_i32 = arith.constant 12 : i32
      %130 = arith.addi %21, %c12_i32 : i32
      %131 = arith.index_cast %130 : i32 to index
      %132 = memref.load %arg1[%131] : memref<16xi32, #tpu.memory_space<smem>>
      %c12_i32_51 = arith.constant 12 : i32
      %c0_i32_52 = arith.constant 0 : i32
      %133 = tpu.memref_slice %arg2[%132, %c0_i32_52] : memref<512x128xf32, #tpu.memory_space<any>> -> memref<1x128xf32, #tpu.memory_space<any>>
      %134 = tpu.memref_squeeze %133 : memref<1x128xf32, #tpu.memory_space<any>> -> memref<128xf32, #tpu.memory_space<any>>
      %c0_i32_53 = arith.constant 0 : i32
      %135 = tpu.memref_slice %arg4[%20, %c12_i32_51, %c0_i32_53] : memref<2x16x128xf32, #tpu.memory_space<vmem>> -> memref<1x1x128xf32, #tpu.memory_space<vmem>>
      %136 = tpu.memref_squeeze %135 : memref<1x1x128xf32, #tpu.memory_space<vmem>> -> memref<128xf32, #tpu.memory_space<vmem>>
      %137 = tpu.memref_slice %arg5[%20] : memref<2x!tpu.dma_semaphore, #tpu.memory_space<semaphore_mem>> -> memref<1x!tpu.dma_semaphore, #tpu.memory_space<semaphore_mem>>
      %138 = tpu.memref_squeeze %137 : memref<1x!tpu.dma_semaphore, #tpu.memory_space<semaphore_mem>> -> memref<!tpu.dma_semaphore, #tpu.memory_space<semaphore_mem>>
      tpu.enqueue_dma source(%134 : memref<128xf32, #tpu.memory_space<any>>) target(%136 : memref<128xf32, #tpu.memory_space<vmem>>) target_semaphore(%138 : memref<!tpu.dma_semaphore, #tpu.memory_space<semaphore_mem>>)
      %c13_i32 = arith.constant 13 : i32
      %139 = arith.addi %21, %c13_i32 : i32
      %140 = arith.index_cast %139 : i32 to index
      %141 = memref.load %arg1[%140] : memref<16xi32, #tpu.memory_space<smem>>
      %c13_i32_54 = arith.constant 13 : i32
      %c0_i32_55 = arith.constant 0 : i32
      %142 = tpu.memref_slice %arg2[%141, %c0_i32_55] : memref<512x128xf32, #tpu.memory_space<any>> -> memref<1x128xf32, #tpu.memory_space<any>>
      %143 = tpu.memref_squeeze %142 : memref<1x128xf32, #tpu.memory_space<any>> -> memref<128xf32, #tpu.memory_space<any>>
      %c0_i32_56 = arith.constant 0 : i32
      %144 = tpu.memref_slice %arg4[%20, %c13_i32_54, %c0_i32_56] : memref<2x16x128xf32, #tpu.memory_space<vmem>> -> memref<1x1x128xf32, #tpu.memory_space<vmem>>
      %145 = tpu.memref_squeeze %144 : memref<1x1x128xf32, #tpu.memory_space<vmem>> -> memref<128xf32, #tpu.memory_space<vmem>>
      %146 = tpu.memref_slice %arg5[%20] : memref<2x!tpu.dma_semaphore, #tpu.memory_space<semaphore_mem>> -> memref<1x!tpu.dma_semaphore, #tpu.memory_space<semaphore_mem>>
      %147 = tpu.memref_squeeze %146 : memref<1x!tpu.dma_semaphore, #tpu.memory_space<semaphore_mem>> -> memref<!tpu.dma_semaphore, #tpu.memory_space<semaphore_mem>>
      tpu.enqueue_dma source(%143 : memref<128xf32, #tpu.memory_space<any>>) target(%145 : memref<128xf32, #tpu.memory_space<vmem>>) target_semaphore(%147 : memref<!tpu.dma_semaphore, #tpu.memory_space<semaphore_mem>>)
      %c14_i32 = arith.constant 14 : i32
      %148 = arith.addi %21, %c14_i32 : i32
      %149 = arith.index_cast %148 : i32 to index
      %150 = memref.load %arg1[%149] : memref<16xi32, #tpu.memory_space<smem>>
      %c14_i32_57 = arith.constant 14 : i32
      %c0_i32_58 = arith.constant 0 : i32
      %151 = tpu.memref_slice %arg2[%150, %c0_i32_58] : memref<512x128xf32, #tpu.memory_space<any>> -> memref<1x128xf32, #tpu.memory_space<any>>
      %152 = tpu.memref_squeeze %151 : memref<1x128xf32, #tpu.memory_space<any>> -> memref<128xf32, #tpu.memory_space<any>>
      %c0_i32_59 = arith.constant 0 : i32
      %153 = tpu.memref_slice %arg4[%20, %c14_i32_57, %c0_i32_59] : memref<2x16x128xf32, #tpu.memory_space<vmem>> -> memref<1x1x128xf32, #tpu.memory_space<vmem>>
      %154 = tpu.memref_squeeze %153 : memref<1x1x128xf32, #tpu.memory_space<vmem>> -> memref<128xf32, #tpu.memory_space<vmem>>
      %155 = tpu.memref_slice %arg5[%20] : memref<2x!tpu.dma_semaphore, #tpu.memory_space<semaphore_mem>> -> memref<1x!tpu.dma_semaphore, #tpu.memory_space<semaphore_mem>>
      %156 = tpu.memref_squeeze %155 : memref<1x!tpu.dma_semaphore, #tpu.memory_space<semaphore_mem>> -> memref<!tpu.dma_semaphore, #tpu.memory_space<semaphore_mem>>
      tpu.enqueue_dma source(%152 : memref<128xf32, #tpu.memory_space<any>>) target(%154 : memref<128xf32, #tpu.memory_space<vmem>>) target_semaphore(%156 : memref<!tpu.dma_semaphore, #tpu.memory_space<semaphore_mem>>)
      %c15_i32 = arith.constant 15 : i32
      %157 = arith.addi %21, %c15_i32 : i32
      %158 = arith.index_cast %157 : i32 to index
      %159 = memref.load %arg1[%158] : memref<16xi32, #tpu.memory_space<smem>>
      %c15_i32_60 = arith.constant 15 : i32
      %c0_i32_61 = arith.constant 0 : i32
      %160 = tpu.memref_slice %arg2[%159, %c0_i32_61] : memref<512x128xf32, #tpu.memory_space<any>> -> memref<1x128xf32, #tpu.memory_space<any>>
      %161 = tpu.memref_squeeze %160 : memref<1x128xf32, #tpu.memory_space<any>> -> memref<128xf32, #tpu.memory_space<any>>
      %c0_i32_62 = arith.constant 0 : i32
      %162 = tpu.memref_slice %arg4[%20, %c15_i32_60, %c0_i32_62] : memref<2x16x128xf32, #tpu.memory_space<vmem>> -> memref<1x1x128xf32, #tpu.memory_space<vmem>>
      %163 = tpu.memref_squeeze %162 : memref<1x1x128xf32, #tpu.memory_space<vmem>> -> memref<128xf32, #tpu.memory_space<vmem>>
      %164 = tpu.memref_slice %arg5[%20] : memref<2x!tpu.dma_semaphore, #tpu.memory_space<semaphore_mem>> -> memref<1x!tpu.dma_semaphore, #tpu.memory_space<semaphore_mem>>
      %165 = tpu.memref_squeeze %164 : memref<1x!tpu.dma_semaphore, #tpu.memory_space<semaphore_mem>> -> memref<!tpu.dma_semaphore, #tpu.memory_space<semaphore_mem>>
      tpu.enqueue_dma source(%161 : memref<128xf32, #tpu.memory_space<any>>) target(%163 : memref<128xf32, #tpu.memory_space<vmem>>) target_semaphore(%165 : memref<!tpu.dma_semaphore, #tpu.memory_space<semaphore_mem>>)
    } else {
    }
    %c0_i32_4 = arith.constant 0 : i32
    %c0_i32_5 = arith.constant 0 : i32
    %8 = tpu.memref_slice %arg2[%c0_i32_4, %c0_i32_5] : memref<512x128xf32, #tpu.memory_space<any>> -> memref<16x128xf32, #tpu.memory_space<any>>
    %c0_i32_6 = arith.constant 0 : i32
    %c0_i32_7 = arith.constant 0 : i32
    %9 = tpu.memref_slice %arg4[%0, %c0_i32_6, %c0_i32_7] : memref<2x16x128xf32, #tpu.memory_space<vmem>> -> memref<1x16x128xf32, #tpu.memory_space<vmem>>
    %10 = tpu.memref_squeeze %9 : memref<1x16x128xf32, #tpu.memory_space<vmem>> -> memref<16x128xf32, #tpu.memory_space<vmem>>
    %11 = tpu.memref_slice %arg5[%0] : memref<2x!tpu.dma_semaphore, #tpu.memory_space<semaphore_mem>> -> memref<1x!tpu.dma_semaphore, #tpu.memory_space<semaphore_mem>>
    %12 = tpu.memref_squeeze %11 : memref<1x!tpu.dma_semaphore, #tpu.memory_space<semaphore_mem>> -> memref<!tpu.dma_semaphore, #tpu.memory_space<semaphore_mem>>
    tpu.wait_dma2 semaphore(%12 : memref<!tpu.dma_semaphore, #tpu.memory_space<semaphore_mem>>) src(%8 : memref<16x128xf32, #tpu.memory_space<any>>) dst(%10 : memref<16x128xf32, #tpu.memory_space<vmem>>)
    %13 = arith.index_cast %0 : i32 to index
    %c0 = arith.constant 0 : index
    %c0_8 = arith.constant 0 : index
    %14 = vector.load %arg4[%13, %c0, %c0_8] : memref<2x16x128xf32, #tpu.memory_space<vmem>>, vector<1x16x128xf32>
    %15 = vector.shape_cast %14 : vector<1x16x128xf32> to vector<16x128xf32>
    %cst = arith.constant 11.3137083 : f32
    %16 = vector.broadcast %cst : f32 to vector<16x128xf32>
    %17 = arith.mulf %15, %16 : vector<16x128xf32>
    %c0_9 = arith.constant 0 : index
    %c0_10 = arith.constant 0 : index
    %18 = vector.load %arg3[%c0_9, %c0_10] : memref<16x128xf32, #tpu.memory_space<vmem>>, vector<16x128xf32>
    tpu.vector_store %arg3[%c0_9, %c0_10], %17 {strides = array<i32>} : memref<16x128xf32, #tpu.memory_space<vmem>>, vector<16x128xf32>,
    return
  }
  func.func @transform_1(%arg0: i32, %arg1: memref<16xi32, #tpu.memory_space<smem>>) -> (i32, i32) {
    %c0_i32 = arith.constant 0 : i32
    %c0_i32_0 = arith.constant 0 : i32
    return %arg0, %c0_i32 : i32, i32
  }
}

</mosaic_0001>

<llo_original>
// kernel: tpu_custom_call.1
$region0: #{tpu_custom_call.1}
  #allocation0 [shape = 'u32[]', space=smem, size = 0x4, offset = 0x4, fixed_abs, tag = 'smem constant byte address 0x4 - core index']
  #allocation1 [shape = 'u32[72,128]{1,0:T(1,128)}', space=vmem, size = 0x9000, scoped, tag = 'internal scratch']
  #allocation2 [shape = 'f32[2,16,128]{2,1,0:T(8,128)}', space=vmem, size = 0x4000, scoped, tag = 'scratch operand']
  #allocation3 [shape = 's32[2]{0}', space=sflag, size = 0x8, scoped, tag = 'scratch operand']
  #allocation4 [shape = 's32[1]{0}', space=sflag, size = 0x4, scoped, tag = 'scoped memory for tpu_custom_call.1']
  #allocation5 [shape = 'u8[512]{0}', space=smem, size = 0x200, scoped, tag = 'prefetched SMEM operand 0']
  #allocation8 [shape = 's32[]', space=sflag, size = 0x4, offset = 0, fixed_abs, tag = 'sflag constant byte address 0x0 - dummy sync flag']
  #allocation9 [shape = 's32[]', space=sflag, size = 0x4, offset = 0, fixed_abs, tag = 'sflag constant byte address 0x0 - dummy sync flag']
  #allocation10 [shape = 'u32[]', space=smem, size = 0x4, offset = 0x44, fixed_abs, tag = 'smem constant byte address 0x44 - assertion arg 0']
  #allocation11 [shape = 'u32[]', space=smem, size = 0x4, offset = 0x48, fixed_abs, tag = 'smem constant byte address 0x48 - assertion arg 1']
  #allocation12 [shape = 's32[]', space=sflag, size = 0x4, offset = 0, fixed_abs, tag = 'sflag constant byte address 0x0 - dummy sync flag']
  #allocation13 [shape = 's32[]', space=sflag, size = 0x4, offset = 0, fixed_abs, tag = 'sflag constant byte address 0x0 - dummy sync flag']
  #allocation14 [shape = 's32[]', space=sflag, size = 0x4, offset = 0, fixed_abs, tag = 'sflag constant byte address 0x0 - dummy sync flag']
  #allocation15 [shape = 's32[]', space=sflag, size = 0x4, offset = 0, fixed_abs, tag = 'sflag constant byte address 0x0 - dummy sync flag']
  #allocation16 [shape = 's32[]', space=sflag, size = 0x4, offset = 0, fixed_abs, tag = 'sflag constant byte address 0x0 - dummy sync flag']
  #allocation17 [shape = 's32[]', space=sflag, size = 0x4, offset = 0, fixed_abs, tag = 'sflag constant byte address 0x0 - dummy sync flag']
  #allocation18 [shape = 's32[]', space=sflag, size = 0x4, offset = 0, fixed_abs, tag = 'sflag constant byte address 0x0 - dummy sync flag']
  #allocation19 [shape = 's32[]', space=sflag, size = 0x4, offset = 0, fixed_abs, tag = 'sflag constant byte address 0x0 - dummy sync flag']
  #allocation20 [shape = 's32[]', space=sflag, size = 0x4, offset = 0, fixed_abs, tag = 'sflag constant byte address 0x0 - dummy sync flag']
  #allocation21 [shape = 's32[]', space=sflag, size = 0x4, offset = 0, fixed_abs, tag = 'sflag constant byte address 0x0 - dummy sync flag']
  #allocation22 [shape = 's32[]', space=sflag, size = 0x4, offset = 0, fixed_abs, tag = 'sflag constant byte address 0x0 - dummy sync flag']
  #allocation23 [shape = 's32[]', space=sflag, size = 0x4, offset = 0, fixed_abs, tag = 'sflag constant byte address 0x0 - dummy sync flag']
  #allocation24 [shape = 's32[]', space=sflag, size = 0x4, offset = 0, fixed_abs, tag = 'sflag constant byte address 0x0 - dummy sync flag']
  #allocation25 [shape = 's32[]', space=sflag, size = 0x4, offset = 0, fixed_abs, tag = 'sflag constant byte address 0x0 - dummy sync flag']
  #allocation26 [shape = 's32[]', space=sflag, size = 0x4, offset = 0, fixed_abs, tag = 'sflag constant byte address 0x0 - dummy sync flag']
  #allocation27 [shape = 's32[]', space=sflag, size = 0x4, offset = 0, fixed_abs, tag = 'sflag constant byte address 0x0 - dummy sync flag']
  #allocation28 [shape = 's32[]', space=sflag, size = 0x4, offset = 0, fixed_abs, tag = 'sflag constant byte address 0x0 - dummy sync flag']
  #allocation29 [shape = 's32[]', space=sflag, size = 0x4, offset = 0, fixed_abs, tag = 'sflag constant byte address 0x0 - dummy sync flag']
  #allocation30 [shape = 's32[]', space=sflag, size = 0x4, offset = 0, fixed_abs, tag = 'sflag constant byte address 0x0 - dummy sync flag']
  #allocation31 [shape = 's32[]', space=sflag, size = 0x4, offset = 0, fixed_abs, tag = 'sflag constant byte address 0x0 - dummy sync flag']
  #allocation32 [shape = 's32[]', space=sflag, size = 0x4, offset = 0, fixed_abs, tag = 'sflag constant byte address 0x0 - dummy sync flag']
  #allocation33 [shape = 's32[]', space=sflag, size = 0x4, offset = 0, fixed_abs, tag = 'sflag constant byte address 0x0 - dummy sync flag']
  #allocation34 [shape = 's32[]', space=sflag, size = 0x4, offset = 0, fixed_abs, tag = 'sflag constant byte address 0x0 - dummy sync flag']
  #allocation35 [shape = 's32[]', space=sflag, size = 0x4, offset = 0, fixed_abs, tag = 'sflag constant byte address 0x0 - dummy sync flag']
  #allocation36 [shape = 's32[]', space=sflag, size = 0x4, offset = 0, fixed_abs, tag = 'sflag constant byte address 0x0 - dummy sync flag']
  #allocation37 [shape = 's32[]', space=sflag, size = 0x4, offset = 0, fixed_abs, tag = 'sflag constant byte address 0x0 - dummy sync flag']
  #allocation38 [shape = 's32[]', space=sflag, size = 0x4, offset = 0, fixed_abs, tag = 'sflag constant byte address 0x0 - dummy sync flag']
  #allocation39 [shape = 's32[]', space=sflag, size = 0x4, offset = 0, fixed_abs, tag = 'sflag constant byte address 0x0 - dummy sync flag']
  #allocation40 [shape = 's32[]', space=sflag, size = 0x4, offset = 0, fixed_abs, tag = 'sflag constant byte address 0x0 - dummy sync flag']
  #allocation41 [shape = 's32[]', space=sflag, size = 0x4, offset = 0, fixed_abs, tag = 'sflag constant byte address 0x0 - dummy sync flag']
  #allocation42 [shape = 's32[]', space=sflag, size = 0x4, offset = 0, fixed_abs, tag = 'sflag constant byte address 0x0 - dummy sync flag']
  #allocation43 [shape = 's32[]', space=sflag, size = 0x4, offset = 0, fixed_abs, tag = 'sflag constant byte address 0x0 - dummy sync flag']
  #allocation44 [shape = 's32[]', space=sflag, size = 0x4, offset = 0, fixed_abs, tag = 'sflag constant byte address 0x0 - dummy sync flag']
  #allocation45 [shape = 's32[]', space=sflag, size = 0x4, offset = 0, fixed_abs, tag = 'sflag constant byte address 0x0 - dummy sync flag']
  #allocation46 [shape = 's32[]', space=sflag, size = 0x4, offset = 0, fixed_abs, tag = 'sflag constant byte address 0x0 - dummy sync flag']
  #allocation47 [shape = 's32[]', space=sflag, size = 0x4, offset = 0, fixed_abs, tag = 'sflag constant byte address 0x0 - dummy sync flag']
  #allocation48 [shape = 's32[]', space=sflag, size = 0x4, offset = 0, fixed_abs, tag = 'sflag constant byte address 0x0 - dummy sync flag']
  #allocation49 [shape = 's32[]', space=sflag, size = 0x4, offset = 0, fixed_abs, tag = 'sflag constant byte address 0x0 - dummy sync flag']
  #allocation50 [shape = 's32[]', space=sflag, size = 0x4, offset = 0, fixed_abs, tag = 'sflag constant byte address 0x0 - dummy sync flag']
  #allocation51 [shape = 's32[]', space=sflag, size = 0x4, offset = 0, fixed_abs, tag = 'sflag constant byte address 0x0 - dummy sync flag']
  #allocation52 [shape = 's32[]', space=sflag, size = 0x4, offset = 0, fixed_abs, tag = 'sflag constant byte address 0x0 - dummy sync flag']
  #allocation53 [shape = 's32[]', space=sflag, size = 0x4, offset = 0, fixed_abs, tag = 'sflag constant byte address 0x0 - dummy sync flag']
  #allocation54 [shape = 's32[]', space=sflag, size = 0x4, offset = 0, fixed_abs, tag = 'sflag constant byte address 0x0 - dummy sync flag']
  #allocation55 [shape = 's32[]', space=sflag, size = 0x4, offset = 0, fixed_abs, tag = 'sflag constant byte address 0x0 - dummy sync flag']
  #allocation56 [shape = 's32[]', space=sflag, size = 0x4, offset = 0, fixed_abs, tag = 'sflag constant byte address 0x0 - dummy sync flag']
  #allocation57 [shape = 's32[]', space=sflag, size = 0x4, offset = 0, fixed_abs, tag = 'sflag constant byte address 0x0 - dummy sync flag']
  #allocation58 [shape = 's32[]', space=sflag, size = 0x4, offset = 0, fixed_abs, tag = 'sflag constant byte address 0x0 - dummy sync flag']
  #allocation59 [shape = 's32[]', space=sflag, size = 0x4, offset = 0, fixed_abs, tag = 'sflag constant byte address 0x0 - dummy sync flag']
  #allocation60 [shape = 's32[]', space=sflag, size = 0x4, offset = 0, fixed_abs, tag = 'sflag constant byte address 0x0 - dummy sync flag']
  #allocation61 [shape = 's32[]', space=sflag, size = 0x4, offset = 0, fixed_abs, tag = 'sflag constant byte address 0x0 - dummy sync flag']
  #allocation62 [shape = 's32[]', space=sflag, size = 0x4, offset = 0, fixed_abs, tag = 'sflag constant byte address 0x0 - dummy sync flag']
  #allocation63 [shape = 's32[]', space=sflag, size = 0x4, offset = 0, fixed_abs, tag = 'sflag constant byte address 0x0 - dummy sync flag']
  #allocation64 [shape = 's32[]', space=sflag, size = 0x4, offset = 0, fixed_abs, tag = 'sflag constant byte address 0x0 - dummy sync flag']
  #allocation65 [shape = 's32[]', space=sflag, size = 0x4, offset = 0, fixed_abs, tag = 'sflag constant byte address 0x0 - dummy sync flag']
  #allocation66 [shape = 's32[]', space=sflag, size = 0x4, offset = 0, fixed_abs, tag = 'sflag constant byte address 0x0 - dummy sync flag']
  #allocation67 [shape = 's32[]', space=sflag, size = 0x4, offset = 0, fixed_abs, tag = 'sflag constant byte address 0x0 - dummy sync flag']
  #allocation68 [shape = 's32[]', space=sflag, size = 0x4, offset = 0, fixed_abs, tag = 'sflag constant byte address 0x0 - dummy sync flag']
  #allocation69 [shape = 's32[]', space=sflag, size = 0x4, offset = 0, fixed_abs, tag = 'sflag constant byte address 0x0 - dummy sync flag']
  #allocation70 [shape = 's32[]', space=sflag, size = 0x4, offset = 0, fixed_abs, tag = 'sflag constant byte address 0x0 - dummy sync flag']
  #allocation71 [shape = 's32[]', space=sflag, size = 0x4, offset = 0, fixed_abs, tag = 'sflag constant byte address 0x0 - dummy sync flag']
  #allocation72 [shape = 's32[]', space=sflag, size = 0x4, offset = 0, fixed_abs, tag = 'sflag constant byte address 0x0 - dummy sync flag']
  #allocation73 [shape = 's32[]', space=sflag, size = 0x4, offset = 0, fixed_abs, tag = 'sflag constant byte address 0x0 - dummy sync flag']
  %s0 = inlined_call_operand.hbm [shape: s32[16], index: 0, kind: input, shape index: {}]
  %s1 = inlined_call_operand.hbm [shape: f32[512,128], index: 1, kind: input, shape index: {}]
  %s2 = inlined_call_operand.hbm [shape: f32[16,128], index: 2, kind: output, shape index: {}]
  %s3 = sld [smem:[#allocation0]]
  $region146: #{tpu_custom_call.1} parent=0
    _
  %s5 = ssub.s32 1, %s3
  %s6 = scalar_select 0, %s5, %s3
  %s8 = sshll.u32 %s0, 4
  %s9 = int_to_ptr.hbm [resolvable:$true] %s8
  %11 = dma.hbm_to_smem %s9, 16, [#allocation5], [#allocation4]
  %13 = dma.done [#allocation4], 16
  %14 = sfence
  $region1: #{tpu_custom_call.1} parent=0
    #allocation6 [shape = 'u8[8192]{0}', space=vmem, size = 0x2000, scoped, tag = 'output window, operand 0, single buffered']
    #allocation7 [shape = 's32[1]{0}', space=sflag, size = 0x4, scoped, tag = 'scoped memory for tpu_custom_call.1']
    %15 = vsyncpa [#allocation7], 0
    %s16 = sand.u32 0, 1
    %p17 = scmp.eq.s32.totalorder 0, 0
    // Predicated region
    $region2: #{tpu_custom_call.1} parent=1 // pred_check
      %p18 = pneg %p17
    $region3: #{tpu_custom_call.1} parent=1 // pred_check_branch
      %20 = sbr.rel (%p18) target = $region5
    $region4: #{tpu_custom_call.1} parent=1 // pred_region
      %s21 = sld [smem:[#allocation5]]
      %s22 = scalar_lea.hbm %s1, %s21
      // Predicated region
      $region6: #{tpu_custom_call.1} parent=4 // pred_check
        _
      $region7: #{tpu_custom_call.1} parent=4 // pred_check_branch
        %24 = sbr.rel target = $region9
      $region8: #{tpu_custom_call.1} parent=4 // pred_region
        %25 = sst [smem:[#allocation10]] [#allocation9]
        %26 = sst [smem:[#allocation11]] [#allocation8]
      $region9: #{tpu_custom_call.1} parent=4 // pred_fallthru
        _
      %28 = shalt.err (0)
      %s30 = sshll.u32 %s22, 4
      %s31 = int_to_ptr.hbm [resolvable:$true] %s30
      %s32 = sshll.u32 [#allocation2], 4
      %s33 = int_to_ptr.vmem [resolvable:$true] %s32
      %35 = dma.hbm_to_vmem [thread:$0]  %s31, 16, %s33, [#allocation3]
      %s36 = sld [smem:[#allocation5 + $0x1]]
      %s37 = scalar_lea.hbm %s1, %s36
      %s38 = scalar_lea.vmem [#allocation2], 1
      // Predicated region
      $region10: #{tpu_custom_call.1} parent=4 // pred_check
        _
      $region11: #{tpu_custom_call.1} parent=4 // pred_check_branch
        %40 = sbr.rel target = $region13
      $region12: #{tpu_custom_call.1} parent=4 // pred_region
        %41 = sst [smem:[#allocation10]] [#allocation13]
        %42 = sst [smem:[#allocation11]] [#allocation12]
      $region13: #{tpu_custom_call.1} parent=4 // pred_fallthru
        _
      %44 = shalt.err (0)
      %s46 = sshll.u32 %s37, 4
      %s47 = int_to_ptr.hbm [resolvable:$true] %s46
      %s48 = sshll.u32 %s38, 4
      %s49 = int_to_ptr.vmem [resolvable:$true] %s48
      %51 = dma.hbm_to_vmem [thread:$0]  %s47, 16, %s49, [#allocation3]
      %s52 = sld [smem:[#allocation5 + $0x2]]
      %s53 = scalar_lea.hbm %s1, %s52
      %s54 = scalar_lea.vmem [#allocation2], 2
      // Predicated region
      $region14: #{tpu_custom_call.1} parent=4 // pred_check
        _
      $region15: #{tpu_custom_call.1} parent=4 // pred_check_branch
        %56 = sbr.rel target = $region17
      $region16: #{tpu_custom_call.1} parent=4 // pred_region
        %57 = sst [smem:[#allocation10]] [#allocation15]
        %58 = sst [smem:[#allocation11]] [#allocation14]
      $region17: #{tpu_custom_call.1} parent=4 // pred_fallthru
        _
      %60 = shalt.err (0)
      %s62 = sshll.u32 %s53, 4
      %s63 = int_to_ptr.hbm [resolvable:$true] %s62
      %s64 = sshll.u32 %s54, 4
      %s65 = int_to_ptr.vmem [resolvable:$true] %s64
      %67 = dma.hbm_to_vmem [thread:$0]  %s63, 16, %s65, [#allocation3]
      %s68 = sld [smem:[#allocation5 + $0x3]]
      %s69 = scalar_lea.hbm %s1, %s68
      %s70 = scalar_lea.vmem [#allocation2], 3
      // Predicated region
      $region18: #{tpu_custom_call.1} parent=4 // pred_check
        _
      $region19: #{tpu_custom_call.1} parent=4 // pred_check_branch
        %72 = sbr.rel target = $region21
      $region20: #{tpu_custom_call.1} parent=4 // pred_region
        %73 = sst [smem:[#allocation10]] [#allocation17]
        %74 = sst [smem:[#allocation11]] [#allocation16]
      $region21: #{tpu_custom_call.1} parent=4 // pred_fallthru
        _
      %76 = shalt.err (0)
      %s78 = sshll.u32 %s69, 4
      %s79 = int_to_ptr.hbm [resolvable:$true] %s78
      %s80 = sshll.u32 %s70, 4
      %s81 = int_to_ptr.vmem [resolvable:$true] %s80
      %83 = dma.hbm_to_vmem [thread:$0]  %s79, 16, %s81, [#allocation3]
      %s84 = sld [smem:[#allocation5 + $0x4]]
      %s85 = scalar_lea.hbm %s1, %s84
      %s86 = scalar_lea.vmem [#allocation2], 4
      // Predicated region
      $region22: #{tpu_custom_call.1} parent=4 // pred_check
        _
      $region23: #{tpu_custom_call.1} parent=4 // pred_check_branch
        %88 = sbr.rel target = $region25
      $region24: #{tpu_custom_call.1} parent=4 // pred_region
        %89 = sst [smem:[#allocation10]] [#allocation19]
        %90 = sst [smem:[#allocation11]] [#allocation18]
      $region25: #{tpu_custom_call.1} parent=4 // pred_fallthru
        _
      %92 = shalt.err (0)
      %s94 = sshll.u32 %s85, 4
      %s95 = int_to_ptr.hbm [resolvable:$true] %s94
      %s96 = sshll.u32 %s86, 4
      %s97 = int_to_ptr.vmem [resolvable:$true] %s96
      %99 = dma.hbm_to_vmem [thread:$0]  %s95, 16, %s97, [#allocation3]
      %s100 = sld [smem:[#allocation5 + $0x5]]
      %s101 = scalar_lea.hbm %s1, %s100
      %s102 = scalar_lea.vmem [#allocation2], 5
      // Predicated region
      $region26: #{tpu_custom_call.1} parent=4 // pred_check
        _
      $region27: #{tpu_custom_call.1} parent=4 // pred_check_branch
        %104 = sbr.rel target = $region29
      $region28: #{tpu_custom_call.1} parent=4 // pred_region
        %105 = sst [smem:[#allocation10]] [#allocation21]
        %106 = sst [smem:[#allocation11]] [#allocation20]
      $region29: #{tpu_custom_call.1} parent=4 // pred_fallthru
        _
      %108 = shalt.err (0)
      %s110 = sshll.u32 %s101, 4
      %s111 = int_to_ptr.hbm [resolvable:$true] %s110
      %s112 = sshll.u32 %s102, 4
      %s113 = int_to_ptr.vmem [resolvable:$true] %s112
      %115 = dma.hbm_to_vmem [thread:$0]  %s111, 16, %s113, [#allocation3]
      %s116 = sld [smem:[#allocation5 + $0x6]]
      %s117 = scalar_lea.hbm %s1, %s116
      %s118 = scalar_lea.vmem [#allocation2], 6
      // Predicated region
      $region30: #{tpu_custom_call.1} parent=4 // pred_check
        _
      $region31: #{tpu_custom_call.1} parent=4 // pred_check_branch
        %120 = sbr.rel target = $region33
      $region32: #{tpu_custom_call.1} parent=4 // pred_region
        %121 = sst [smem:[#allocation10]] [#allocation23]
        %122 = sst [smem:[#allocation11]] [#allocation22]
      $region33: #{tpu_custom_call.1} parent=4 // pred_fallthru
        _
      %124 = shalt.err (0)
      %s126 = sshll.u32 %s117, 4
      %s127 = int_to_ptr.hbm [resolvable:$true] %s126
      %s128 = sshll.u32 %s118, 4
      %s129 = int_to_ptr.vmem [resolvable:$true] %s128
      %131 = dma.hbm_to_vmem [thread:$0]  %s127, 16, %s129, [#allocation3]
      %s132 = sld [smem:[#allocation5 + $0x7]]
      %s133 = scalar_lea.hbm %s1, %s132
      %s134 = scalar_lea.vmem [#allocation2], 7
      // Predicated region
      $region34: #{tpu_custom_call.1} parent=4 // pred_check
        _
      $region35: #{tpu_custom_call.1} parent=4 // pred_check_branch
        %136 = sbr.rel target = $region37
      $region36: #{tpu_custom_call.1} parent=4 // pred_region
        %137 = sst [smem:[#allocation10]] [#allocation25]
        %138 = sst [smem:[#allocation11]] [#allocation24]
      $region37: #{tpu_custom_call.1} parent=4 // pred_fallthru
        _
      %140 = shalt.err (0)
      %s142 = sshll.u32 %s133, 4
      %s143 = int_to_ptr.hbm [resolvable:$true] %s142
      %s144 = sshll.u32 %s134, 4
      %s145 = int_to_ptr.vmem [resolvable:$true] %s144
      %147 = dma.hbm_to_vmem [thread:$0]  %s143, 16, %s145, [#allocation3]
      %s148 = sld [smem:[#allocation5 + $0x8]]
      %s149 = scalar_lea.hbm %s1, %s148
      %s150 = scalar_lea.vmem [#allocation2], 8
      // Predicated region
      $region38: #{tpu_custom_call.1} parent=4 // pred_check
        _
      $region39: #{tpu_custom_call.1} parent=4 // pred_check_branch
        %152 = sbr.rel target = $region41
      $region40: #{tpu_custom_call.1} parent=4 // pred_region
        %153 = sst [smem:[#allocation10]] [#allocation27]
        %154 = sst [smem:[#allocation11]] [#allocation26]
      $region41: #{tpu_custom_call.1} parent=4 // pred_fallthru
        _
      %156 = shalt.err (0)
      %s158 = sshll.u32 %s149, 4
      %s159 = int_to_ptr.hbm [resolvable:$true] %s158
      %s160 = sshll.u32 %s150, 4
      %s161 = int_to_ptr.vmem [resolvable:$true] %s160
      %163 = dma.hbm_to_vmem [thread:$0]  %s159, 16, %s161, [#allocation3]
      %s164 = sld [smem:[#allocation5 + $0x9]]
      %s165 = scalar_lea.hbm %s1, %s164
      %s166 = scalar_lea.vmem [#allocation2], 9
      // Predicated region
      $region42: #{tpu_custom_call.1} parent=4 // pred_check
        _
      $region43: #{tpu_custom_call.1} parent=4 // pred_check_branch
        %168 = sbr.rel target = $region45
      $region44: #{tpu_custom_call.1} parent=4 // pred_region
        %169 = sst [smem:[#allocation10]] [#allocation29]
        %170 = sst [smem:[#allocation11]] [#allocation28]
      $region45: #{tpu_custom_call.1} parent=4 // pred_fallthru
        _
      %172 = shalt.err (0)
      %s174 = sshll.u32 %s165, 4
      %s175 = int_to_ptr.hbm [resolvable:$true] %s174
      %s176 = sshll.u32 %s166, 4
      %s177 = int_to_ptr.vmem [resolvable:$true] %s176
      %179 = dma.hbm_to_vmem [thread:$0]  %s175, 16, %s177, [#allocation3]
      %s180 = sld [smem:[#allocation5 + $0xa]]
      %s181 = scalar_lea.hbm %s1, %s180
      %s182 = scalar_lea.vmem [#allocation2], 10
      // Predicated region
      $region46: #{tpu_custom_call.1} parent=4 // pred_check
        _
      $region47: #{tpu_custom_call.1} parent=4 // pred_check_branch
        %184 = sbr.rel target = $region49
      $region48: #{tpu_custom_call.1} parent=4 // pred_region
        %185 = sst [smem:[#allocation10]] [#allocation31]
        %186 = sst [smem:[#allocation11]] [#allocation30]
      $region49: #{tpu_custom_call.1} parent=4 // pred_fallthru
        _
      %188 = shalt.err (0)
      %s190 = sshll.u32 %s181, 4
      %s191 = int_to_ptr.hbm [resolvable:$true] %s190
      %s192 = sshll.u32 %s182, 4
      %s193 = int_to_ptr.vmem [resolvable:$true] %s192
      %195 = dma.hbm_to_vmem [thread:$0]  %s191, 16, %s193, [#allocation3]
      %s196 = sld [smem:[#allocation5 + $0xb]]
      %s197 = scalar_lea.hbm %s1, %s196
      %s198 = scalar_lea.vmem [#allocation2], 11
      // Predicated region
      $region50: #{tpu_custom_call.1} parent=4 // pred_check
        _
      $region51: #{tpu_custom_call.1} parent=4 // pred_check_branch
        %200 = sbr.rel target = $region53
      $region52: #{tpu_custom_call.1} parent=4 // pred_region
        %201 = sst [smem:[#allocation10]] [#allocation33]
        %202 = sst [smem:[#allocation11]] [#allocation32]
      $region53: #{tpu_custom_call.1} parent=4 // pred_fallthru
        _
      %204 = shalt.err (0)
      %s206 = sshll.u32 %s197, 4
      %s207 = int_to_ptr.hbm [resolvable:$true] %s206
      %s208 = sshll.u32 %s198, 4
      %s209 = int_to_ptr.vmem [resolvable:$true] %s208
      %211 = dma.hbm_to_vmem [thread:$0]  %s207, 16, %s209, [#allocation3]
      %s212 = sld [smem:[#allocation5 + $0xc]]
      %s213 = scalar_lea.hbm %s1, %s212
      %s214 = scalar_lea.vmem [#allocation2], 12
      // Predicated region
      $region54: #{tpu_custom_call.1} parent=4 // pred_check
        _
      $region55: #{tpu_custom_call.1} parent=4 // pred_check_branch
        %216 = sbr.rel target = $region57
      $region56: #{tpu_custom_call.1} parent=4 // pred_region
        %217 = sst [smem:[#allocation10]] [#allocation35]
        %218 = sst [smem:[#allocation11]] [#allocation34]
      $region57: #{tpu_custom_call.1} parent=4 // pred_fallthru
        _
      %220 = shalt.err (0)
      %s222 = sshll.u32 %s213, 4
      %s223 = int_to_ptr.hbm [resolvable:$true] %s222
      %s224 = sshll.u32 %s214, 4
      %s225 = int_to_ptr.vmem [resolvable:$true] %s224
      %227 = dma.hbm_to_vmem [thread:$0]  %s223, 16, %s225, [#allocation3]
      %s228 = sld [smem:[#allocation5 + $0xd]]
      %s229 = scalar_lea.hbm %s1, %s228
      %s230 = scalar_lea.vmem [#allocation2], 13
      // Predicated region
      $region58: #{tpu_custom_call.1} parent=4 // pred_check
        _
      $region59: #{tpu_custom_call.1} parent=4 // pred_check_branch
        %232 = sbr.rel target = $region61
      $region60: #{tpu_custom_call.1} parent=4 // pred_region
        %233 = sst [smem:[#allocation10]] [#allocation37]
        %234 = sst [smem:[#allocation11]] [#allocation36]
      $region61: #{tpu_custom_call.1} parent=4 // pred_fallthru
        _
      %236 = shalt.err (0)
      %s238 = sshll.u32 %s229, 4
      %s239 = int_to_ptr.hbm [resolvable:$true] %s238
      %s240 = sshll.u32 %s230, 4
      %s241 = int_to_ptr.vmem [resolvable:$true] %s240
      %243 = dma.hbm_to_vmem [thread:$0]  %s239, 16, %s241, [#allocation3]
      %s244 = sld [smem:[#allocation5 + $0xe]]
      %s245 = scalar_lea.hbm %s1, %s244
      %s246 = scalar_lea.vmem [#allocation2], 14
      // Predicated region
      $region62: #{tpu_custom_call.1} parent=4 // pred_check
        _
      $region63: #{tpu_custom_call.1} parent=4 // pred_check_branch
        %248 = sbr.rel target = $region65
      $region64: #{tpu_custom_call.1} parent=4 // pred_region
        %249 = sst [smem:[#allocation10]] [#allocation39]
        %250 = sst [smem:[#allocation11]] [#allocation38]
      $region65: #{tpu_custom_call.1} parent=4 // pred_fallthru
        _
      %252 = shalt.err (0)
      %s254 = sshll.u32 %s245, 4
      %s255 = int_to_ptr.hbm [resolvable:$true] %s254
      %s256 = sshll.u32 %s246, 4
      %s257 = int_to_ptr.vmem [resolvable:$true] %s256
      %259 = dma.hbm_to_vmem [thread:$0]  %s255, 16, %s257, [#allocation3]
      %s260 = sld [smem:[#allocation5 + $0xf]]
      %s261 = scalar_lea.hbm %s1, %s260
      %s262 = scalar_lea.vmem [#allocation2], 15
      // Predicated region
      $region66: #{tpu_custom_call.1} parent=4 // pred_check
        _
      $region67: #{tpu_custom_call.1} parent=4 // pred_check_branch
        %264 = sbr.rel target = $region69
      $region68: #{tpu_custom_call.1} parent=4 // pred_region
        %265 = sst [smem:[#allocation10]] [#allocation41]
        %266 = sst [smem:[#allocation11]] [#allocation40]
      $region69: #{tpu_custom_call.1} parent=4 // pred_fallthru
        _
      %268 = shalt.err (0)
      %s270 = sshll.u32 %s261, 4
      %s271 = int_to_ptr.hbm [resolvable:$true] %s270
      %s272 = sshll.u32 %s262, 4
      %s273 = int_to_ptr.vmem [resolvable:$true] %s272
      %275 = dma.hbm_to_vmem [thread:$0]  %s271, 16, %s273, [#allocation3]
    $region5: #{tpu_custom_call.1} parent=1 // pred_fallthru
      _
    %s276 = sadd.s32 0, 1
    %p277 = scmp.lt.s32.totalorder %s276, 1
    // Predicated region
    $region70: #{tpu_custom_call.1} parent=1 // pred_check
      %p278 = pneg %p277
    $region71: #{tpu_custom_call.1} parent=1 // pred_check_branch
      %280 = sbr.rel (%p278) target = $region73
    $region72: #{tpu_custom_call.1} parent=1 // pred_region
      %s281 = ssub.s32 1, %s16
      %s282 = smul.u32 %s276, 16
      %s283 = sld [smem:[#allocation5 + %s282]]
      %s284 = scalar_lea.hbm %s1, %s283
      %s285 = smul.u32 %s281, 16
      %s286 = scalar_lea.vmem [#allocation2], %s285
      %s287 = scalar_lea.sflag [#allocation3], %s281
      // Predicated region
      $region74: #{tpu_custom_call.1} parent=72 // pred_check
        _
      $region75: #{tpu_custom_call.1} parent=72 // pred_check_branch
        %289 = sbr.rel target = $region77
      $region76: #{tpu_custom_call.1} parent=72 // pred_region
        %290 = sst [smem:[#allocation10]] [#allocation43]
        %291 = sst [smem:[#allocation11]] [#allocation42]
      $region77: #{tpu_custom_call.1} parent=72 // pred_fallthru
        _
      %293 = shalt.err (0)
      %s295 = sshll.u32 %s284, 4
      %s296 = int_to_ptr.hbm [resolvable:$true] %s295
      %s297 = sshll.u32 %s286, 4
      %s298 = int_to_ptr.vmem [resolvable:$true] %s297
      %300 = dma.hbm_to_vmem [thread:$0]  %s296, 16, %s298, %s287
      %s301 = sadd.s32 %s282, 1
      %s302 = sld [smem:[#allocation5 + %s301]]
      %s303 = scalar_lea.hbm %s1, %s302
      %s304 = sadd.s32 1, %s285
      %s305 = scalar_lea.vmem [#allocation2], %s304
      // Predicated region
      $region78: #{tpu_custom_call.1} parent=72 // pred_check
        _
      $region79: #{tpu_custom_call.1} parent=72 // pred_check_branch
        %307 = sbr.rel target = $region81
      $region80: #{tpu_custom_call.1} parent=72 // pred_region
        %308 = sst [smem:[#allocation10]] [#allocation45]
        %309 = sst [smem:[#allocation11]] [#allocation44]
      $region81: #{tpu_custom_call.1} parent=72 // pred_fallthru
        _
      %311 = shalt.err (0)
      %s313 = sshll.u32 %s303, 4
      %s314 = int_to_ptr.hbm [resolvable:$true] %s313
      %s315 = sshll.u32 %s305, 4
      %s316 = int_to_ptr.vmem [resolvable:$true] %s315
      %318 = dma.hbm_to_vmem [thread:$0]  %s314, 16, %s316, %s287
      %s319 = sadd.s32 %s282, 2
      %s320 = sld [smem:[#allocation5 + %s319]]
      %s321 = scalar_lea.hbm %s1, %s320
      %s322 = sadd.s32 2, %s285
      %s323 = scalar_lea.vmem [#allocation2], %s322
      // Predicated region
      $region82: #{tpu_custom_call.1} parent=72 // pred_check
        _
      $region83: #{tpu_custom_call.1} parent=72 // pred_check_branch
        %325 = sbr.rel target = $region85
      $region84: #{tpu_custom_call.1} parent=72 // pred_region
        %326 = sst [smem:[#allocation10]] [#allocation47]
        %327 = sst [smem:[#allocation11]] [#allocation46]
      $region85: #{tpu_custom_call.1} parent=72 // pred_fallthru
        _
      %329 = shalt.err (0)
      %s331 = sshll.u32 %s321, 4
      %s332 = int_to_ptr.hbm [resolvable:$true] %s331
      %s333 = sshll.u32 %s323, 4
      %s334 = int_to_ptr.vmem [resolvable:$true] %s333
      %336 = dma.hbm_to_vmem [thread:$0]  %s332, 16, %s334, %s287
      %s337 = sadd.s32 %s282, 3
      %s338 = sld [smem:[#allocation5 + %s337]]
      %s339 = scalar_lea.hbm %s1, %s338
      %s340 = sadd.s32 3, %s285
      %s341 = scalar_lea.vmem [#allocation2], %s340
      // Predicated region
      $region86: #{tpu_custom_call.1} parent=72 // pred_check
        _
      $region87: #{tpu_custom_call.1} parent=72 // pred_check_branch
        %343 = sbr.rel target = $region89
      $region88: #{tpu_custom_call.1} parent=72 // pred_region
        %344 = sst [smem:[#allocation10]] [#allocation49]
        %345 = sst [smem:[#allocation11]] [#allocation48]
      $region89: #{tpu_custom_call.1} parent=72 // pred_fallthru
        _
      %347 = shalt.err (0)
      %s349 = sshll.u32 %s339, 4
      %s350 = int_to_ptr.hbm [resolvable:$true] %s349
      %s351 = sshll.u32 %s341, 4
      %s352 = int_to_ptr.vmem [resolvable:$true] %s351
      %354 = dma.hbm_to_vmem [thread:$0]  %s350, 16, %s352, %s287
      %s355 = sadd.s32 %s282, 4
      %s356 = sld [smem:[#allocation5 + %s355]]
      %s357 = scalar_lea.hbm %s1, %s356
      %s358 = sadd.s32 4, %s285
      %s359 = scalar_lea.vmem [#allocation2], %s358
      // Predicated region
      $region90: #{tpu_custom_call.1} parent=72 // pred_check
        _
      $region91: #{tpu_custom_call.1} parent=72 // pred_check_branch
        %361 = sbr.rel target = $region93
      $region92: #{tpu_custom_call.1} parent=72 // pred_region
        %362 = sst [smem:[#allocation10]] [#allocation51]
        %363 = sst [smem:[#allocation11]] [#allocation50]
      $region93: #{tpu_custom_call.1} parent=72 // pred_fallthru
        _
      %365 = shalt.err (0)
      %s367 = sshll.u32 %s357, 4
      %s368 = int_to_ptr.hbm [resolvable:$true] %s367
      %s369 = sshll.u32 %s359, 4
      %s370 = int_to_ptr.vmem [resolvable:$true] %s369
      %372 = dma.hbm_to_vmem [thread:$0]  %s368, 16, %s370, %s287
      %s373 = sadd.s32 %s282, 5
      %s374 = sld [smem:[#allocation5 + %s373]]
      %s375 = scalar_lea.hbm %s1, %s374
      %s376 = sadd.s32 5, %s285
      %s377 = scalar_lea.vmem [#allocation2], %s376
      // Predicated region
      $region94: #{tpu_custom_call.1} parent=72 // pred_check
        _
      $region95: #{tpu_custom_call.1} parent=72 // pred_check_branch
        %379 = sbr.rel target = $region97
      $region96: #{tpu_custom_call.1} parent=72 // pred_region
        %380 = sst [smem:[#allocation10]] [#allocation53]
        %381 = sst [smem:[#allocation11]] [#allocation52]
      $region97: #{tpu_custom_call.1} parent=72 // pred_fallthru
        _
      %383 = shalt.err (0)
      %s385 = sshll.u32 %s375, 4
      %s386 = int_to_ptr.hbm [resolvable:$true] %s385
      %s387 = sshll.u32 %s377, 4
      %s388 = int_to_ptr.vmem [resolvable:$true] %s387
      %390 = dma.hbm_to_vmem [thread:$0]  %s386, 16, %s388, %s287
      %s391 = sadd.s32 %s282, 6
      %s392 = sld [smem:[#allocation5 + %s391]]
      %s393 = scalar_lea.hbm %s1, %s392
      %s394 = sadd.s32 6, %s285
      %s395 = scalar_lea.vmem [#allocation2], %s394
      // Predicated region
      $region98: #{tpu_custom_call.1} parent=72 // pred_check
        _
      $region99: #{tpu_custom_call.1} parent=72 // pred_check_branch
        %397 = sbr.rel target = $region101
      $region100: #{tpu_custom_call.1} parent=72 // pred_region
        %398 = sst [smem:[#allocation10]] [#allocation55]
        %399 = sst [smem:[#allocation11]] [#allocation54]
      $region101: #{tpu_custom_call.1} parent=72 // pred_fallthru
        _
      %401 = shalt.err (0)
      %s403 = sshll.u32 %s393, 4
      %s404 = int_to_ptr.hbm [resolvable:$true] %s403
      %s405 = sshll.u32 %s395, 4
      %s406 = int_to_ptr.vmem [resolvable:$true] %s405
      %408 = dma.hbm_to_vmem [thread:$0]  %s404, 16, %s406, %s287
      %s409 = sadd.s32 %s282, 7
      %s410 = sld [smem:[#allocation5 + %s409]]
      %s411 = scalar_lea.hbm %s1, %s410
      %s412 = sadd.s32 7, %s285
      %s413 = scalar_lea.vmem [#allocation2], %s412
      // Predicated region
      $region102: #{tpu_custom_call.1} parent=72 // pred_check
        _
      $region103: #{tpu_custom_call.1} parent=72 // pred_check_branch
        %415 = sbr.rel target = $region105
      $region104: #{tpu_custom_call.1} parent=72 // pred_region
        %416 = sst [smem:[#allocation10]] [#allocation57]
        %417 = sst [smem:[#allocation11]] [#allocation56]
      $region105: #{tpu_custom_call.1} parent=72 // pred_fallthru
        _
      %419 = shalt.err (0)
      %s421 = sshll.u32 %s411, 4
      %s422 = int_to_ptr.hbm [resolvable:$true] %s421
      %s423 = sshll.u32 %s413, 4
      %s424 = int_to_ptr.vmem [resolvable:$true] %s423
      %426 = dma.hbm_to_vmem [thread:$0]  %s422, 16, %s424, %s287
      %s427 = sadd.s32 %s282, 8
      %s428 = sld [smem:[#allocation5 + %s427]]
      %s429 = scalar_lea.hbm %s1, %s428
      %s430 = sadd.s32 8, %s285
      %s431 = scalar_lea.vmem [#allocation2], %s430
      // Predicated region
      $region106: #{tpu_custom_call.1} parent=72 // pred_check
        _
      $region107: #{tpu_custom_call.1} parent=72 // pred_check_branch
        %433 = sbr.rel target = $region109
      $region108: #{tpu_custom_call.1} parent=72 // pred_region
        %434 = sst [smem:[#allocation10]] [#allocation59]
        %435 = sst [smem:[#allocation11]] [#allocation58]
      $region109: #{tpu_custom_call.1} parent=72 // pred_fallthru
        _
      %437 = shalt.err (0)
      %s439 = sshll.u32 %s429, 4
      %s440 = int_to_ptr.hbm [resolvable:$true] %s439
      %s441 = sshll.u32 %s431, 4
      %s442 = int_to_ptr.vmem [resolvable:$true] %s441
      %444 = dma.hbm_to_vmem [thread:$0]  %s440, 16, %s442, %s287
      %s445 = sadd.s32 %s282, 9
      %s446 = sld [smem:[#allocation5 + %s445]]
      %s447 = scalar_lea.hbm %s1, %s446
      %s448 = sadd.s32 9, %s285
      %s449 = scalar_lea.vmem [#allocation2], %s448
      // Predicated region
      $region110: #{tpu_custom_call.1} parent=72 // pred_check
        _
      $region111: #{tpu_custom_call.1} parent=72 // pred_check_branch
        %451 = sbr.rel target = $region113
      $region112: #{tpu_custom_call.1} parent=72 // pred_region
        %452 = sst [smem:[#allocation10]] [#allocation61]
        %453 = sst [smem:[#allocation11]] [#allocation60]
      $region113: #{tpu_custom_call.1} parent=72 // pred_fallthru
        _
      %455 = shalt.err (0)
      %s457 = sshll.u32 %s447, 4
      %s458 = int_to_ptr.hbm [resolvable:$true] %s457
      %s459 = sshll.u32 %s449, 4
      %s460 = int_to_ptr.vmem [resolvable:$true] %s459
      %462 = dma.hbm_to_vmem [thread:$0]  %s458, 16, %s460, %s287
      %s463 = sadd.s32 %s282, 10
      %s464 = sld [smem:[#allocation5 + %s463]]
      %s465 = scalar_lea.hbm %s1, %s464
      %s466 = sadd.s32 10, %s285
      %s467 = scalar_lea.vmem [#allocation2], %s466
      // Predicated region
      $region114: #{tpu_custom_call.1} parent=72 // pred_check
        _
      $region115: #{tpu_custom_call.1} parent=72 // pred_check_branch
        %469 = sbr.rel target = $region117
      $region116: #{tpu_custom_call.1} parent=72 // pred_region
        %470 = sst [smem:[#allocation10]] [#allocation63]
        %471 = sst [smem:[#allocation11]] [#allocation62]
      $region117: #{tpu_custom_call.1} parent=72 // pred_fallthru
        _
      %473 = shalt.err (0)
      %s475 = sshll.u32 %s465, 4
      %s476 = int_to_ptr.hbm [resolvable:$true] %s475
      %s477 = sshll.u32 %s467, 4
      %s478 = int_to_ptr.vmem [resolvable:$true] %s477
      %480 = dma.hbm_to_vmem [thread:$0]  %s476, 16, %s478, %s287
      %s481 = sadd.s32 %s282, 11
      %s482 = sld [smem:[#allocation5 + %s481]]
      %s483 = scalar_lea.hbm %s1, %s482
      %s484 = sadd.s32 11, %s285
      %s485 = scalar_lea.vmem [#allocation2], %s484
      // Predicated region
      $region118: #{tpu_custom_call.1} parent=72 // pred_check
        _
      $region119: #{tpu_custom_call.1} parent=72 // pred_check_branch
        %487 = sbr.rel target = $region121
      $region120: #{tpu_custom_call.1} parent=72 // pred_region
        %488 = sst [smem:[#allocation10]] [#allocation65]
        %489 = sst [smem:[#allocation11]] [#allocation64]
      $region121: #{tpu_custom_call.1} parent=72 // pred_fallthru
        _
      %491 = shalt.err (0)
      %s493 = sshll.u32 %s483, 4
      %s494 = int_to_ptr.hbm [resolvable:$true] %s493
      %s495 = sshll.u32 %s485, 4
      %s496 = int_to_ptr.vmem [resolvable:$true] %s495
      %498 = dma.hbm_to_vmem [thread:$0]  %s494, 16, %s496, %s287
      %s499 = sadd.s32 %s282, 12
      %s500 = sld [smem:[#allocation5 + %s499]]
      %s501 = scalar_lea.hbm %s1, %s500
      %s502 = sadd.s32 12, %s285
      %s503 = scalar_lea.vmem [#allocation2], %s502
      // Predicated region
      $region122: #{tpu_custom_call.1} parent=72 // pred_check
        _
      $region123: #{tpu_custom_call.1} parent=72 // pred_check_branch
        %505 = sbr.rel target = $region125
      $region124: #{tpu_custom_call.1} parent=72 // pred_region
        %506 = sst [smem:[#allocation10]] [#allocation67]
        %507 = sst [smem:[#allocation11]] [#allocation66]
      $region125: #{tpu_custom_call.1} parent=72 // pred_fallthru
        _
      %509 = shalt.err (0)
      %s511 = sshll.u32 %s501, 4
      %s512 = int_to_ptr.hbm [resolvable:$true] %s511
      %s513 = sshll.u32 %s503, 4
      %s514 = int_to_ptr.vmem [resolvable:$true] %s513
      %516 = dma.hbm_to_vmem [thread:$0]  %s512, 16, %s514, %s287
      %s517 = sadd.s32 %s282, 13
      %s518 = sld [smem:[#allocation5 + %s517]]
      %s519 = scalar_lea.hbm %s1, %s518
      %s520 = sadd.s32 13, %s285
      %s521 = scalar_lea.vmem [#allocation2], %s520
      // Predicated region
      $region126: #{tpu_custom_call.1} parent=72 // pred_check
        _
      $region127: #{tpu_custom_call.1} parent=72 // pred_check_branch
        %523 = sbr.rel target = $region129
      $region128: #{tpu_custom_call.1} parent=72 // pred_region
        %524 = sst [smem:[#allocation10]] [#allocation69]
        %525 = sst [smem:[#allocation11]] [#allocation68]
      $region129: #{tpu_custom_call.1} parent=72 // pred_fallthru
        _
      %527 = shalt.err (0)
      %s529 = sshll.u32 %s519, 4
      %s530 = int_to_ptr.hbm [resolvable:$true] %s529
      %s531 = sshll.u32 %s521, 4
      %s532 = int_to_ptr.vmem [resolvable:$true] %s531
      %534 = dma.hbm_to_vmem [thread:$0]  %s530, 16, %s532, %s287
      %s535 = sadd.s32 %s282, 14
      %s536 = sld [smem:[#allocation5 + %s535]]
      %s537 = scalar_lea.hbm %s1, %s536
      %s538 = sadd.s32 14, %s285
      %s539 = scalar_lea.vmem [#allocation2], %s538
      // Predicated region
      $region130: #{tpu_custom_call.1} parent=72 // pred_check
        _
      $region131: #{tpu_custom_call.1} parent=72 // pred_check_branch
        %541 = sbr.rel target = $region133
      $region132: #{tpu_custom_call.1} parent=72 // pred_region
        %542 = sst [smem:[#allocation10]] [#allocation71]
        %543 = sst [smem:[#allocation11]] [#allocation70]
      $region133: #{tpu_custom_call.1} parent=72 // pred_fallthru
        _
      %545 = shalt.err (0)
      %s547 = sshll.u32 %s537, 4
      %s548 = int_to_ptr.hbm [resolvable:$true] %s547
      %s549 = sshll.u32 %s539, 4
      %s550 = int_to_ptr.vmem [resolvable:$true] %s549
      %552 = dma.hbm_to_vmem [thread:$0]  %s548, 16, %s550, %s287
      %s553 = sadd.s32 %s282, 15
      %s554 = sld [smem:[#allocation5 + %s553]]
      %s555 = scalar_lea.hbm %s1, %s554
      %s556 = sadd.s32 15, %s285
      %s557 = scalar_lea.vmem [#allocation2], %s556
      // Predicated region
      $region134: #{tpu_custom_call.1} parent=72 // pred_check
        _
      $region135: #{tpu_custom_call.1} parent=72 // pred_check_branch
        %559 = sbr.rel target = $region137
      $region136: #{tpu_custom_call.1} parent=72 // pred_region
        %560 = sst [smem:[#allocation10]] [#allocation73]
        %561 = sst [smem:[#allocation11]] [#allocation72]
      $region137: #{tpu_custom_call.1} parent=72 // pred_fallthru
        _
      %563 = shalt.err (0)
      %s565 = sshll.u32 %s555, 4
      %s566 = int_to_ptr.hbm [resolvable:$true] %s565
      %s567 = sshll.u32 %s557, 4
      %s568 = int_to_ptr.vmem [resolvable:$true] %s567
      %570 = dma.hbm_to_vmem [thread:$0]  %s566, 16, %s568, %s287
    $region73: #{tpu_custom_call.1} parent=1 // pred_fallthru
      _
    %s571 = smul.u32 %s16, 16
    %s572 = scalar_lea.vmem [#allocation2], %s571
    %s573 = scalar_lea.sflag [#allocation3], %s16
    %s574 = smul.u32 16, 1
    %s575 = sshll.u32 %s574, 4
    %576 = dma.done %s573, %s575
    %v577 = vld [vmem:[%s572] sm:$0xff]
    %v578 = vld [vmem:[%s572 + $0x8] sm:$0xff]
    %v579 = vmul.f32 %v577, 11.313708
    %v580 = vmul.f32 %v578, 11.313708
    %581 = vst [vmem:[#allocation6] sm:$0xff] %v579
    %582 = vst [vmem:[#allocation6 + $0x8] sm:$0xff] %v580
    // Predicated region
    $region138: #{tpu_custom_call.1} parent=1 // pred_check
      _
    $region139: #{tpu_custom_call.1} parent=1 // pred_check_branch
      %584 = sbr.rel (0) target = $region141
    $region140: #{tpu_custom_call.1} parent=1 // pred_region
      %586 = vsyncadd [#allocation7], 0
      %s587 = sshll.u32 [#allocation6], 4
      %s588 = int_to_ptr.vmem [resolvable:$true] %s587
      %s589 = sshll.u32 %s2, 4
      %s590 = int_to_ptr.hbm [resolvable:$true] %s589
      %595 = dma.vmem_to_hbm [thread:$0]  %s588, 256, %s590, [#allocation7], 128, 128, 8
    $region141: #{tpu_custom_call.1} parent=1 // pred_fallthru
      _
    // Predicated region
    $region142: #{tpu_custom_call.1} parent=1 // pred_check
      _
    $region143: #{tpu_custom_call.1} parent=1 // pred_check_branch
      %597 = sbr.rel (0) target = $region145
    $region144: #{tpu_custom_call.1} parent=1 // pred_region
      %599 = dma.done [#allocation7], 256
    $region145: #{tpu_custom_call.1} parent=1 // pred_fallthru
      _
    %600 = vsyncpa [#allocation7], 1
  %601 = vsyncmov [#allocation3]
  %s602 = vpop.sfrf %601
  %p603 = scmp.eq.s32.totalorder %s602, 0
  %p604 = pneg %p603
  %606 = shalt.err (%p604)
  %s607 = scalar_lea.sflag [#allocation3], 1
  %608 = vsyncmov %s607
  %s609 = vpop.sfrf %608
  %p610 = scmp.eq.s32.totalorder %s609, 0
  %p611 = pneg %p610
  %613 = shalt.err (%p611)

</llo_original>
